<compile_context>
chip_gen: v5e
topology: v5e:2x2
jax: 0.10.0
libtpu: 0.0.40
codegen_flags: <defaults>
</compile_context>

<pallas_src>
import functools

import jax
import jax.numpy as jnp
from jax.experimental import pallas as pl
from jax.experimental.pallas import tpu as pltpu


def _round_up(x, m):
    return (x + m - 1) // m * m


def _pick_nb(n, hw, target_lanes=512, max_lanes=2048):
    """How many batch images to fold into the lane axis per grid step.

    Widen the lane dim toward `target_lanes` but keep >=2 grid steps when there is any
    batch left, so v7x's two TensorCores both get work via the 'parallel' grid axis.
    """
    nb = 1
    for cand in range(2, n + 1):
        if n % cand or cand * hw > max_lanes:
            continue
        if n // cand < 2:
            continue
        nb = cand
        if cand * hw >= target_lanes:
            break
    return nb


# ------------------------------- fused kernel -------------------------------
def _dense_block_kernel(x_ref, m_ref,
                        w1_ref, w2_ref, w3_ref, w4_ref, w5_ref,
                        b1_ref, b2_ref, b3_ref, b4_ref, b5_ref,
                        o_ref, col_ref, *, W, lanes, cp0, gp, mxu_dtype):
    """One grid step = NB lane-folded images. Activations are (C, NB*HW):
    channels on sublanes, (image, pixel) flattened onto lanes."""
    # 9 static flat-lane shifts of the 3x3 stencil (value at lane l comes from lane l+d).
    shifts = [(-((kh - 1) * W + (kw - 1))) % lanes for kh in range(3) for kw in range(3)]
    # Per-tap validity masks, precomputed in the wrapper (zero for out-of-image taps,
    # including wrap across folded images).  Loaded once, reused by all 5 layers.
    masks = [m_ref[t:t + 1, :] for t in range(9)]

    def write_taps(slab, c, row_off):
        # slab: (c, lanes) f32 -> append its 9 masked shifted copies to the im2col scratch
        # at rows [row_off, row_off + 9*c).  c and row_off are multiples of 8 (static).
        taps = []
        for t, s in enumerate(shifts):
            if s == 0:                       # center tap: always valid, no shift
                taps.append(slab)
            else:
                taps.append(pltpu.roll(slab, s, 1) * masks[t])
        col_ref[row_off:row_off + 9 * c, :] = jnp.concatenate(taps, axis=0)

    def layer(w_ref, b_ref, rows, lrelu):
        # Single MXU matmul over the im2col prefix built so far (K = rows).
        rhs = col_ref[0:rows, :].astype(mxu_dtype)
        y = jnp.dot(w_ref[...], rhs, preferred_element_type=jnp.float32)
        y = y + b_ref[...]                   # (Cout_pad, 1) broadcast over lanes (f32)
        if lrelu:
            y = jnp.where(y >= 0, y, 0.2 * y)  # LeakyReLU(0.2) on the VPU, f32
        return y

    x = x_ref[0]                             # (cp0, lanes) channel-padded input, f32
    write_taps(x, cp0, 0)
    x1 = layer(w1_ref, b1_ref, 9 * cp0, True)
    write_taps(x1, gp, 9 * cp0)
    x2 = layer(w2_ref, b2_ref, 9 * (cp0 + gp), True)
    write_taps(x2, gp, 9 * (cp0 + gp))
    x3 = layer(w3_ref, b3_ref, 9 * (cp0 + 2 * gp), True)
    write_taps(x3, gp, 9 * (cp0 + 2 * gp))
    x4 = layer(w4_ref, b4_ref, 9 * (cp0 + 3 * gp), True)
    write_taps(x4, gp, 9 * (cp0 + 3 * gp))
    x5 = layer(w5_ref, b5_ref, 9 * (cp0 + 4 * gp), False)   # (C_out_pad, lanes)
    o_ref[0] = x5.astype(o_ref.dtype)


# ----------------------------- wrapper / packing -----------------------------
def _pack_weight(w_hwio, b, src_real, src_pad, cout_pad):
    """(3,3,Cin_total_real,Cout) HWIO -> (Cout_pad, sum_s 9*Cp_s) im2col weight.

    Columns are slab-major (x | x1 | x2 | ...), within each slab tap-major / channel-minor,
    matching the incremental im2col scratch layout.  Zero columns are inserted for padded
    channels of each slab and zero rows (and zero bias) for padded output channels, so
    padded feature rows stay exactly zero through every layer.
    """
    cout = w_hwio.shape[-1]
    blocks, off = [], 0
    for cr, cp in zip(src_real, src_pad):
        blk = w_hwio[:, :, off:off + cr, :]                     # (3, 3, cr, cout)
        if cp > cr:
            blk = jnp.pad(blk, ((0, 0), (0, 0), (0, cp - cr), (0, 0)))
        # -> (cout, 9, cp) tap-major, channel-minor -> (cout, 9*cp)
        blk = jnp.transpose(blk.reshape(9, cp, cout), (2, 0, 1)).reshape(cout, 9 * cp)
        blocks.append(blk)
        off += cr
    w_mat = jnp.concatenate(blocks, axis=1)                     # (cout, sum 9*cp)
    if cout_pad > cout:
        w_mat = jnp.pad(w_mat, ((0, cout_pad - cout), (0, 0)))
        b = jnp.pad(b, (0, cout_pad - cout))
    return w_mat, b.reshape(cout_pad, 1).astype(jnp.float32)


def dense_block(x_nchw, params, *, gc, nb=None, mxu_dtype=jnp.bfloat16):
    """Fused DenseBlock forward. x_nchw: (N, C_in, H, W) f32 -> (N, C_out, H, W) f32."""
    N, C_in, H, W = x_nchw.shape
    HW = H * W
    C_out = params["w5"].shape[-1]
    CP0 = _round_up(C_in, 8)          # input channels padded to the sublane tile
    GP = _round_up(gc, 8)             # growth channels padded to the sublane tile
    COP = _round_up(C_out, 8)         # output channels padded to the sublane tile
    if nb is None:
        nb = _pick_nb(N, HW)
    assert N % nb == 0
    G = N // nb
    lanes = nb * HW

    # Channel-pad once, then fold nb images into the lane axis: (G, CP0, nb*HW),
    # lane index = b*HW + pixel.
    xk = jnp.pad(x_nchw, ((0, 0), (0, CP0 - C_in), (0, 0), (0, 0))).reshape(N, CP0, HW)
    xk = xk.reshape(G, nb, CP0, HW).transpose(0, 2, 1, 3).reshape(G, CP0, lanes)

    # 9 tap-validity masks over the folded lane axis (lane % HW keeps cross-image wrap
    # masked).  Computed once; constant index_map keeps them VMEM-resident.
    lane = jnp.arange(lanes, dtype=jnp.int32)
    p = lane % HW
    r, c = p // W, p % W
    masks = jnp.stack(
        [((r + dy >= 0) & (r + dy < H) & (c + dx >= 0) & (c + dx < W)).astype(jnp.float32)
         for dy in (-1, 0, 1) for dx in (-1, 0, 1)], axis=0)    # (9, lanes)

    cout_pads = [GP, GP, GP, GP, COP]
    ws, bs = [], []
    for i in range(1, 6):
        src_real = [C_in] + [gc] * (i - 1)
        src_pad = [CP0] + [GP] * (i - 1)
        w_mat, b_mat = _pack_weight(params[f"w{i}"], params[f"b{i}"],
                                    src_real, src_pad, cout_pads[i - 1])
        ws.append(w_mat.astype(mxu_dtype))     # bf16 MXU inputs (f32 accumulation)
        bs.append(b_mat)                       # bias stays f32
    total_rows = 9 * (CP0 + 4 * GP)

    kernel = functools.partial(_dense_block_kernel, W=W, lanes=lanes,
                               cp0=CP0, gp=GP, mxu_dtype=mxu_dtype)
    # TODO(synk): for production-scale H*W, tile the lane (HW) axis in 128-multiples with a
    # one-W-row halo per tile and size the per-tile working set to ~32 MiB for v7x's 64 MiB
    # VMEM; unnecessary at 16x16 where the f32 im2col scratch is ~0.7 MB.
    out = pl.pallas_call(
        kernel,
        out_shape=jax.ShapeDtypeStruct((G, COP, lanes), jnp.float32),
        grid=(G,),
        in_specs=[pl.BlockSpec((1, CP0, lanes), lambda g: (g, 0, 0)),
                  pl.BlockSpec(masks.shape, lambda g: (0, 0))]
                 + [pl.BlockSpec(w.shape, lambda g: (0, 0)) for w in ws]
                 + [pl.BlockSpec(b.shape, lambda g: (0, 0)) for b in bs],
        out_specs=pl.BlockSpec((1, COP, lanes), lambda g: (g, 0, 0)),
        scratch_shapes=[pltpu.VMEM((total_rows, lanes), jnp.float32)],
        compiler_params=pltpu.CompilerParams(dimension_semantics=("parallel",)),
    )(xk, masks, *ws, *bs)

    out = out.reshape(G, COP, nb, HW).transpose(0, 2, 1, 3).reshape(N, COP, HW)
    return out[:, :C_out].reshape(N, C_out, H, W)


# ------------------------------ parameter init ------------------------------
def init_dense_block_params(key, channel_in, channel_out, gc=8, scale=0.1):
    """Deterministic synthetic init (shapes match the PyTorch module, HWIO layout)."""
    # TODO(synk): PyTorch uses xavier*0.1 for conv1-4 and zero-scale for conv5; scaled
    # normal is used for all layers here so the output is non-trivial to check.
    cins = [channel_in, channel_in + gc, channel_in + 2 * gc,
            channel_in + 3 * gc, channel_in + 4 * gc]
    couts = [gc, gc, gc, gc, channel_out]
    params = {}
    for i, (ci, co) in enumerate(zip(cins, couts), start=1):
        key, kw, kb = jax.random.split(key, 3)
        params[f"w{i}"] = (scale * jax.random.normal(kw, (3, 3, ci, co))).astype(jnp.float32)
        params[f"b{i}"] = (scale * jax.random.normal(kb, (co,))).astype(jnp.float32)
    return params


# ------------------------ pure-JAX reference for checking ------------------------
def _conv3x3_ref(x, w, b, apply_lrelu, dtype):
    y = jax.lax.conv_general_dilated(
        x.astype(dtype), w.astype(dtype), (1, 1), "SAME",
        dimension_numbers=("NCHW", "HWIO", "NCHW"),
        preferred_element_type=jnp.float32) + b.reshape(1, -1, 1, 1)
    return jnp.where(y >= 0, y, 0.2 * y) if apply_lrelu else y


def dense_block_ref(x, p, dtype=jnp.float32):
    x1 = _conv3x3_ref(x, p["w1"], p["b1"], True, dtype)
    x2 = _conv3x3_ref(jnp.concatenate([x, x1], 1), p["w2"], p["b2"], True, dtype)
    x3 = _conv3x3_ref(jnp.concatenate([x, x1, x2], 1), p["w3"], p["b3"], True, dtype)
    x4 = _conv3x3_ref(jnp.concatenate([x, x1, x2, x3], 1), p["w4"], p["b4"], True, dtype)
    x5 = _conv3x3_ref(jnp.concatenate([x, x1, x2, x3, x4], 1), p["w5"], p["b5"], False, dtype)
    return x5


if __name__ == "__main__":
    key = jax.random.PRNGKey(0)
    k_x, k_p, k_x4 = jax.random.split(key, 3)

    N, C_in, H, W = 2, 4, 16, 16        # small NCHW shapes, matching the module
    C_out, gc = 4, 8

    x_nchw = jax.random.normal(k_x, (N, C_in, H, W), dtype=jnp.float32)
    params = init_dense_block_params(k_p, C_in, C_out, gc=gc, scale=0.1)

    # 1) f32 MXU path vs f32 reference: exact-semantics check of the fused kernel.
    out_f32 = jax.block_until_ready(
        jax.jit(functools.partial(dense_block, gc=gc, mxu_dtype=jnp.float32))(x_nchw, params))
    ref_f32 = jax.block_until_ready(dense_block_ref(x_nchw, params, jnp.float32))
    assert out_f32.shape == (N, C_out, H, W)
    assert jnp.allclose(out_f32, ref_f32, atol=1e-4, rtol=1e-4)

    # 2) Default bf16-MXU path vs a reference with the same per-layer bf16 input casts.
    out_bf = jax.block_until_ready(
        jax.jit(functools.partial(dense_block, gc=gc))(x_nchw, params))
    ref_bf = jax.block_until_ready(dense_block_ref(x_nchw, params, jnp.bfloat16))
    assert out_bf.shape == (N, C_out, H, W)
    assert jnp.allclose(out_bf, ref_bf, atol=5e-3, rtol=5e-3)

    # 3) Batch lane-folding path (N=4 -> NB=2, 512-lane tiles, 2 grid steps).
    x4 = jax.random.normal(k_x4, (4, C_in, H, W), dtype=jnp.float32)
    out4 = jax.block_until_ready(
        jax.jit(functools.partial(dense_block, gc=gc))(x4, params))
    ref4 = jax.block_until_ready(dense_block_ref(x4, params, jnp.bfloat16))
    assert out4.shape == (4, C_out, H, W)
    assert jnp.allclose(out4, ref4, atol=5e-3, rtol=5e-3)

    print("KERNEL_OK")
</pallas_src>

<mosaic_0001>
module attributes {stable_mosaic.version = 11 : i64} {
  func.func @_dense_block_kernel(%arg0: i32, %arg1: memref<1x8x256xf32, #tpu.memory_space<vmem>>, %arg2: memref<9x256xf32, #tpu.memory_space<vmem>>, %arg3: memref<8x72xf32, #tpu.memory_space<vmem>>, %arg4: memref<8x144xf32, #tpu.memory_space<vmem>>, %arg5: memref<8x216xf32, #tpu.memory_space<vmem>>, %arg6: memref<8x288xf32, #tpu.memory_space<vmem>>, %arg7: memref<8x360xf32, #tpu.memory_space<vmem>>, %arg8: memref<8x1xf32, #tpu.memory_space<vmem>>, %arg9: memref<8x1xf32, #tpu.memory_space<vmem>>, %arg10: memref<8x1xf32, #tpu.memory_space<vmem>>, %arg11: memref<8x1xf32, #tpu.memory_space<vmem>>, %arg12: memref<8x1xf32, #tpu.memory_space<vmem>>, %arg13: memref<1x8x256xf32, #tpu.memory_space<vmem>>, %arg14: memref<360x256xf32, #tpu.memory_space<vmem>>) attributes {dimension_semantics = [#tpu.dimension_semantics<parallel>], iteration_bounds = array<i64: 2>, scalar_prefetch = 0 : i64, scratch_operands = 1 : i64, tpu.core_type = #tpu.core_type<tc>, window_params = [{transform_indices = @transform_0, window_bounds = array<i64: 1, 8, 256>}, {pipeline_mode = #tpu.pipeline_mode<synchronous>, transform_indices = @transform_1, window_bounds = array<i64: 9, 256>}, {pipeline_mode = #tpu.pipeline_mode<synchronous>, transform_indices = @transform_2, window_bounds = array<i64: 8, 72>}, {pipeline_mode = #tpu.pipeline_mode<synchronous>, transform_indices = @transform_3, window_bounds = array<i64: 8, 144>}, {pipeline_mode = #tpu.pipeline_mode<synchronous>, transform_indices = @transform_4, window_bounds = array<i64: 8, 216>}, {pipeline_mode = #tpu.pipeline_mode<synchronous>, transform_indices = @transform_5, window_bounds = array<i64: 8, 288>}, {pipeline_mode = #tpu.pipeline_mode<synchronous>, transform_indices = @transform_6, window_bounds = array<i64: 8, 360>}, {pipeline_mode = #tpu.pipeline_mode<synchronous>, transform_indices = @transform_7, window_bounds = array<i64: 8, 1>}, {pipeline_mode = #tpu.pipeline_mode<synchronous>, transform_indices = @transform_8, window_bounds = array<i64: 8, 1>}, {pipeline_mode = #tpu.pipeline_mode<synchronous>, transform_indices = @transform_9, window_bounds = array<i64: 8, 1>}, {pipeline_mode = #tpu.pipeline_mode<synchronous>, transform_indices = @transform_10, window_bounds = array<i64: 8, 1>}, {pipeline_mode = #tpu.pipeline_mode<synchronous>, transform_indices = @transform_11, window_bounds = array<i64: 8, 1>}, {transform_indices = @transform_12, window_bounds = array<i64: 1, 8, 256>}]} {
    %c0 = arith.constant 0 : index
    %c0_0 = arith.constant 0 : index
    %0 = vector.load %arg2[%c0, %c0_0] : memref<9x256xf32, #tpu.memory_space<vmem>>, vector<1x256xf32>
    %c1 = arith.constant 1 : index
    %c0_1 = arith.constant 0 : index
    %1 = vector.load %arg2[%c1, %c0_1] : memref<9x256xf32, #tpu.memory_space<vmem>>, vector<1x256xf32>
    %c2 = arith.constant 2 : index
    %c0_2 = arith.constant 0 : index
    %2 = vector.load %arg2[%c2, %c0_2] : memref<9x256xf32, #tpu.memory_space<vmem>>, vector<1x256xf32>
    %c3 = arith.constant 3 : index
    %c0_3 = arith.constant 0 : index
    %3 = vector.load %arg2[%c3, %c0_3] : memref<9x256xf32, #tpu.memory_space<vmem>>, vector<1x256xf32>
    %c5 = arith.constant 5 : index
    %c0_4 = arith.constant 0 : index
    %4 = vector.load %arg2[%c5, %c0_4] : memref<9x256xf32, #tpu.memory_space<vmem>>, vector<1x256xf32>
    %c6 = arith.constant 6 : index
    %c0_5 = arith.constant 0 : index
    %5 = vector.load %arg2[%c6, %c0_5] : memref<9x256xf32, #tpu.memory_space<vmem>>, vector<1x256xf32>
    %c7 = arith.constant 7 : index
    %c0_6 = arith.constant 0 : index
    %6 = vector.load %arg2[%c7, %c0_6] : memref<9x256xf32, #tpu.memory_space<vmem>>, vector<1x256xf32>
    %c8 = arith.constant 8 : index
    %c0_7 = arith.constant 0 : index
    %7 = vector.load %arg2[%c8, %c0_7] : memref<9x256xf32, #tpu.memory_space<vmem>>, vector<1x256xf32>
    %c0_8 = arith.constant 0 : index
    %c0_9 = arith.constant 0 : index
    %c0_10 = arith.constant 0 : index
    %8 = vector.load %arg1[%c0_8, %c0_9, %c0_10] : memref<1x8x256xf32, #tpu.memory_space<vmem>>, vector<1x8x256xf32>
    %9 = vector.shape_cast %8 : vector<1x8x256xf32> to vector<8x256xf32>
    %c17_i32 = arith.constant 17 : i32
    %10 = tpu.dynamic_rotate %9 by %c17_i32 dim 1 : vector<8x256xf32>, i32 -> vector<8x256xf32>
    %11 = vector.broadcast %0 : vector<1x256xf32> to vector<8x256xf32>
    %12 = arith.mulf %10, %11 : vector<8x256xf32>
    %c16_i32 = arith.constant 16 : i32
    %13 = tpu.dynamic_rotate %9 by %c16_i32 dim 1 : vector<8x256xf32>, i32 -> vector<8x256xf32>
    %14 = vector.broadcast %1 : vector<1x256xf32> to vector<8x256xf32>
    %15 = arith.mulf %13, %14 : vector<8x256xf32>
    %c15_i32 = arith.constant 15 : i32
    %16 = tpu.dynamic_rotate %9 by %c15_i32 dim 1 : vector<8x256xf32>, i32 -> vector<8x256xf32>
    %17 = vector.broadcast %2 : vector<1x256xf32> to vector<8x256xf32>
    %18 = arith.mulf %16, %17 : vector<8x256xf32>
    %c1_i32 = arith.constant 1 : i32
    %19 = tpu.dynamic_rotate %9 by %c1_i32 dim 1 : vector<8x256xf32>, i32 -> vector<8x256xf32>
    %20 = vector.broadcast %3 : vector<1x256xf32> to vector<8x256xf32>
    %21 = arith.mulf %19, %20 : vector<8x256xf32>
    %c255_i32 = arith.constant 255 : i32
    %22 = tpu.dynamic_rotate %9 by %c255_i32 dim 1 : vector<8x256xf32>, i32 -> vector<8x256xf32>
    %23 = vector.broadcast %4 : vector<1x256xf32> to vector<8x256xf32>
    %24 = arith.mulf %22, %23 : vector<8x256xf32>
    %c241_i32 = arith.constant 241 : i32
    %25 = tpu.dynamic_rotate %9 by %c241_i32 dim 1 : vector<8x256xf32>, i32 -> vector<8x256xf32>
    %26 = vector.broadcast %5 : vector<1x256xf32> to vector<8x256xf32>
    %27 = arith.mulf %25, %26 : vector<8x256xf32>
    %c240_i32 = arith.constant 240 : i32
    %28 = tpu.dynamic_rotate %9 by %c240_i32 dim 1 : vector<8x256xf32>, i32 -> vector<8x256xf32>
    %29 = vector.broadcast %6 : vector<1x256xf32> to vector<8x256xf32>
    %30 = arith.mulf %28, %29 : vector<8x256xf32>
    %c239_i32 = arith.constant 239 : i32
    %31 = tpu.dynamic_rotate %9 by %c239_i32 dim 1 : vector<8x256xf32>, i32 -> vector<8x256xf32>
    %32 = vector.broadcast %7 : vector<1x256xf32> to vector<8x256xf32>
    %33 = arith.mulf %31, %32 : vector<8x256xf32>
    %34 = tpu.concatenate %12, %15, %18, %21, %9, %24, %27, %30, %33 in 0 : vector<8x256xf32>, vector<8x256xf32>, vector<8x256xf32>, vector<8x256xf32>, vector<8x256xf32>, vector<8x256xf32>, vector<8x256xf32>, vector<8x256xf32>, vector<8x256xf32> -> vector<72x256xf32>
    %c0_11 = arith.constant 0 : index
    %c0_12 = arith.constant 0 : index
    %35 = vector.load %arg14[%c0_11, %c0_12] : memref<360x256xf32, #tpu.memory_space<vmem>>, vector<72x256xf32>
    tpu.vector_store %arg14[%c0_11, %c0_12], %34 {strides = array<i32>} : memref<360x256xf32, #tpu.memory_space<vmem>>, vector<72x256xf32>,
    %c0_13 = arith.constant 0 : index
    %c0_14 = arith.constant 0 : index
    %36 = vector.load %arg14[%c0_13, %c0_14] : memref<360x256xf32, #tpu.memory_space<vmem>>, vector<72x256xf32>
    %c0_15 = arith.constant 0 : index
    %c0_16 = arith.constant 0 : index
    %37 = vector.load %arg3[%c0_15, %c0_16] : memref<8x72xf32, #tpu.memory_space<vmem>>, vector<8x72xf32>
    %cst = arith.constant dense<0.000000e+00> : vector<8x256xf32>
    %38 = tpu.matmul %37, %36, %cst {dimension_numbers = #tpu.dot_dimension_numbers<[1], [0], [0], [1], [0, 0, 1, 1], [], []>} : vector<8x72xf32>, vector<72x256xf32>, vector<8x256xf32> -> vector<8x256xf32>
    %c0_17 = arith.constant 0 : index
    %c0_18 = arith.constant 0 : index
    %39 = vector.load %arg8[%c0_17, %c0_18] : memref<8x1xf32, #tpu.memory_space<vmem>>, vector<8x1xf32>
    %40 = vector.broadcast %39 : vector<8x1xf32> to vector<8x256xf32>
    %41 = arith.addf %38, %40 : vector<8x256xf32>
    %cst_19 = arith.constant 0.000000e+00 : f32
    %42 = vector.broadcast %cst_19 : f32 to vector<8x256xf32>
    %43 = arith.cmpf oge, %41, %42 : vector<8x256xf32>
    %cst_20 = arith.constant 2.000000e-01 : f32
    %44 = vector.broadcast %cst_20 : f32 to vector<8x256xf32>
    %45 = arith.mulf %44, %41 : vector<8x256xf32>
    %46 = arith.select %43, %41, %45 : vector<8x256xi1>, vector<8x256xf32>
    %c17_i32_21 = arith.constant 17 : i32
    %47 = tpu.dynamic_rotate %46 by %c17_i32_21 dim 1 : vector<8x256xf32>, i32 -> vector<8x256xf32>
    %48 = vector.broadcast %0 : vector<1x256xf32> to vector<8x256xf32>
    %49 = arith.mulf %47, %48 : vector<8x256xf32>
    %c16_i32_22 = arith.constant 16 : i32
    %50 = tpu.dynamic_rotate %46 by %c16_i32_22 dim 1 : vector<8x256xf32>, i32 -> vector<8x256xf32>
    %51 = vector.broadcast %1 : vector<1x256xf32> to vector<8x256xf32>
    %52 = arith.mulf %50, %51 : vector<8x256xf32>
    %c15_i32_23 = arith.constant 15 : i32
    %53 = tpu.dynamic_rotate %46 by %c15_i32_23 dim 1 : vector<8x256xf32>, i32 -> vector<8x256xf32>
    %54 = vector.broadcast %2 : vector<1x256xf32> to vector<8x256xf32>
    %55 = arith.mulf %53, %54 : vector<8x256xf32>
    %c1_i32_24 = arith.constant 1 : i32
    %56 = tpu.dynamic_rotate %46 by %c1_i32_24 dim 1 : vector<8x256xf32>, i32 -> vector<8x256xf32>
    %57 = vector.broadcast %3 : vector<1x256xf32> to vector<8x256xf32>
    %58 = arith.mulf %56, %57 : vector<8x256xf32>
    %c255_i32_25 = arith.constant 255 : i32
    %59 = tpu.dynamic_rotate %46 by %c255_i32_25 dim 1 : vector<8x256xf32>, i32 -> vector<8x256xf32>
    %60 = vector.broadcast %4 : vector<1x256xf32> to vector<8x256xf32>
    %61 = arith.mulf %59, %60 : vector<8x256xf32>
    %c241_i32_26 = arith.constant 241 : i32
    %62 = tpu.dynamic_rotate %46 by %c241_i32_26 dim 1 : vector<8x256xf32>, i32 -> vector<8x256xf32>
    %63 = vector.broadcast %5 : vector<1x256xf32> to vector<8x256xf32>
    %64 = arith.mulf %62, %63 : vector<8x256xf32>
    %c240_i32_27 = arith.constant 240 : i32
    %65 = tpu.dynamic_rotate %46 by %c240_i32_27 dim 1 : vector<8x256xf32>, i32 -> vector<8x256xf32>
    %66 = vector.broadcast %6 : vector<1x256xf32> to vector<8x256xf32>
    %67 = arith.mulf %65, %66 : vector<8x256xf32>
    %c239_i32_28 = arith.constant 239 : i32
    %68 = tpu.dynamic_rotate %46 by %c239_i32_28 dim 1 : vector<8x256xf32>, i32 -> vector<8x256xf32>
    %69 = vector.broadcast %7 : vector<1x256xf32> to vector<8x256xf32>
    %70 = arith.mulf %68, %69 : vector<8x256xf32>
    %71 = tpu.concatenate %49, %52, %55, %58, %46, %61, %64, %67, %70 in 0 : vector<8x256xf32>, vector<8x256xf32>, vector<8x256xf32>, vector<8x256xf32>, vector<8x256xf32>, vector<8x256xf32>, vector<8x256xf32>, vector<8x256xf32>, vector<8x256xf32> -> vector<72x256xf32>
    %c72 = arith.constant 72 : index
    %c0_29 = arith.constant 0 : index
    %72 = vector.load %arg14[%c72, %c0_29] : memref<360x256xf32, #tpu.memory_space<vmem>>, vector<72x256xf32>
    tpu.vector_store %arg14[%c72, %c0_29], %71 {strides = array<i32>} : memref<360x256xf32, #tpu.memory_space<vmem>>, vector<72x256xf32>,
    %c0_30 = arith.constant 0 : index
    %c0_31 = arith.constant 0 : index
    %73 = vector.load %arg14[%c0_30, %c0_31] : memref<360x256xf32, #tpu.memory_space<vmem>>, vector<144x256xf32>
    %c0_32 = arith.constant 0 : index
    %c0_33 = arith.constant 0 : index
    %74 = vector.load %arg4[%c0_32, %c0_33] : memref<8x144xf32, #tpu.memory_space<vmem>>, vector<8x144xf32>
    %cst_34 = arith.constant dense<0.000000e+00> : vector<8x256xf32>
    %75 = tpu.matmul %74, %73, %cst_34 {dimension_numbers = #tpu.dot_dimension_numbers<[1], [0], [0], [1], [0, 0, 1, 1], [], []>} : vector<8x144xf32>, vector<144x256xf32>, vector<8x256xf32> -> vector<8x256xf32>
    %c0_35 = arith.constant 0 : index
    %c0_36 = arith.constant 0 : index
    %76 = vector.load %arg9[%c0_35, %c0_36] : memref<8x1xf32, #tpu.memory_space<vmem>>, vector<8x1xf32>
    %77 = vector.broadcast %76 : vector<8x1xf32> to vector<8x256xf32>
    %78 = arith.addf %75, %77 : vector<8x256xf32>
    %cst_37 = arith.constant 0.000000e+00 : f32
    %79 = vector.broadcast %cst_37 : f32 to vector<8x256xf32>
    %80 = arith.cmpf oge, %78, %79 : vector<8x256xf32>
    %cst_38 = arith.constant 2.000000e-01 : f32
    %81 = vector.broadcast %cst_38 : f32 to vector<8x256xf32>
    %82 = arith.mulf %81, %78 : vector<8x256xf32>
    %83 = arith.select %80, %78, %82 : vector<8x256xi1>, vector<8x256xf32>
    %c17_i32_39 = arith.constant 17 : i32
    %84 = tpu.dynamic_rotate %83 by %c17_i32_39 dim 1 : vector<8x256xf32>, i32 -> vector<8x256xf32>
    %85 = vector.broadcast %0 : vector<1x256xf32> to vector<8x256xf32>
    %86 = arith.mulf %84, %85 : vector<8x256xf32>
    %c16_i32_40 = arith.constant 16 : i32
    %87 = tpu.dynamic_rotate %83 by %c16_i32_40 dim 1 : vector<8x256xf32>, i32 -> vector<8x256xf32>
    %88 = vector.broadcast %1 : vector<1x256xf32> to vector<8x256xf32>
    %89 = arith.mulf %87, %88 : vector<8x256xf32>
    %c15_i32_41 = arith.constant 15 : i32
    %90 = tpu.dynamic_rotate %83 by %c15_i32_41 dim 1 : vector<8x256xf32>, i32 -> vector<8x256xf32>
    %91 = vector.broadcast %2 : vector<1x256xf32> to vector<8x256xf32>
    %92 = arith.mulf %90, %91 : vector<8x256xf32>
    %c1_i32_42 = arith.constant 1 : i32
    %93 = tpu.dynamic_rotate %83 by %c1_i32_42 dim 1 : vector<8x256xf32>, i32 -> vector<8x256xf32>
    %94 = vector.broadcast %3 : vector<1x256xf32> to vector<8x256xf32>
    %95 = arith.mulf %93, %94 : vector<8x256xf32>
    %c255_i32_43 = arith.constant 255 : i32
    %96 = tpu.dynamic_rotate %83 by %c255_i32_43 dim 1 : vector<8x256xf32>, i32 -> vector<8x256xf32>
    %97 = vector.broadcast %4 : vector<1x256xf32> to vector<8x256xf32>
    %98 = arith.mulf %96, %97 : vector<8x256xf32>
    %c241_i32_44 = arith.constant 241 : i32
    %99 = tpu.dynamic_rotate %83 by %c241_i32_44 dim 1 : vector<8x256xf32>, i32 -> vector<8x256xf32>
    %100 = vector.broadcast %5 : vector<1x256xf32> to vector<8x256xf32>
    %101 = arith.mulf %99, %100 : vector<8x256xf32>
    %c240_i32_45 = arith.constant 240 : i32
    %102 = tpu.dynamic_rotate %83 by %c240_i32_45 dim 1 : vector<8x256xf32>, i32 -> vector<8x256xf32>
    %103 = vector.broadcast %6 : vector<1x256xf32> to vector<8x256xf32>
    %104 = arith.mulf %102, %103 : vector<8x256xf32>
    %c239_i32_46 = arith.constant 239 : i32
    %105 = tpu.dynamic_rotate %83 by %c239_i32_46 dim 1 : vector<8x256xf32>, i32 -> vector<8x256xf32>
    %106 = vector.broadcast %7 : vector<1x256xf32> to vector<8x256xf32>
    %107 = arith.mulf %105, %106 : vector<8x256xf32>
    %108 = tpu.concatenate %86, %89, %92, %95, %83, %98, %101, %104, %107 in 0 : vector<8x256xf32>, vector<8x256xf32>, vector<8x256xf32>, vector<8x256xf32>, vector<8x256xf32>, vector<8x256xf32>, vector<8x256xf32>, vector<8x256xf32>, vector<8x256xf32> -> vector<72x256xf32>
    %c144 = arith.constant 144 : index
    %c0_47 = arith.constant 0 : index
    %109 = vector.load %arg14[%c144, %c0_47] : memref<360x256xf32, #tpu.memory_space<vmem>>, vector<72x256xf32>
    tpu.vector_store %arg14[%c144, %c0_47], %108 {strides = array<i32>} : memref<360x256xf32, #tpu.memory_space<vmem>>, vector<72x256xf32>,
    %c0_48 = arith.constant 0 : index
    %c0_49 = arith.constant 0 : index
    %110 = vector.load %arg14[%c0_48, %c0_49] : memref<360x256xf32, #tpu.memory_space<vmem>>, vector<216x256xf32>
    %c0_50 = arith.constant 0 : index
    %c0_51 = arith.constant 0 : index
    %111 = vector.load %arg5[%c0_50, %c0_51] : memref<8x216xf32, #tpu.memory_space<vmem>>, vector<8x216xf32>
    %cst_52 = arith.constant dense<0.000000e+00> : vector<8x256xf32>
    %112 = tpu.matmul %111, %110, %cst_52 {dimension_numbers = #tpu.dot_dimension_numbers<[1], [0], [0], [1], [0, 0, 1, 1], [], []>} : vector<8x216xf32>, vector<216x256xf32>, vector<8x256xf32> -> vector<8x256xf32>
    %c0_53 = arith.constant 0 : index
    %c0_54 = arith.constant 0 : index
    %113 = vector.load %arg10[%c0_53, %c0_54] : memref<8x1xf32, #tpu.memory_space<vmem>>, vector<8x1xf32>
    %114 = vector.broadcast %113 : vector<8x1xf32> to vector<8x256xf32>
    %115 = arith.addf %112, %114 : vector<8x256xf32>
    %cst_55 = arith.constant 0.000000e+00 : f32
    %116 = vector.broadcast %cst_55 : f32 to vector<8x256xf32>
    %117 = arith.cmpf oge, %115, %116 : vector<8x256xf32>
    %cst_56 = arith.constant 2.000000e-01 : f32
    %118 = vector.broadcast %cst_56 : f32 to vector<8x256xf32>
    %119 = arith.mulf %118, %115 : vector<8x256xf32>
    %120 = arith.select %117, %115, %119 : vector<8x256xi1>, vector<8x256xf32>
    %c17_i32_57 = arith.constant 17 : i32
    %121 = tpu.dynamic_rotate %120 by %c17_i32_57 dim 1 : vector<8x256xf32>, i32 -> vector<8x256xf32>
    %122 = vector.broadcast %0 : vector<1x256xf32> to vector<8x256xf32>
    %123 = arith.mulf %121, %122 : vector<8x256xf32>
    %c16_i32_58 = arith.constant 16 : i32
    %124 = tpu.dynamic_rotate %120 by %c16_i32_58 dim 1 : vector<8x256xf32>, i32 -> vector<8x256xf32>
    %125 = vector.broadcast %1 : vector<1x256xf32> to vector<8x256xf32>
    %126 = arith.mulf %124, %125 : vector<8x256xf32>
    %c15_i32_59 = arith.constant 15 : i32
    %127 = tpu.dynamic_rotate %120 by %c15_i32_59 dim 1 : vector<8x256xf32>, i32 -> vector<8x256xf32>
    %128 = vector.broadcast %2 : vector<1x256xf32> to vector<8x256xf32>
    %129 = arith.mulf %127, %128 : vector<8x256xf32>
    %c1_i32_60 = arith.constant 1 : i32
    %130 = tpu.dynamic_rotate %120 by %c1_i32_60 dim 1 : vector<8x256xf32>, i32 -> vector<8x256xf32>
    %131 = vector.broadcast %3 : vector<1x256xf32> to vector<8x256xf32>
    %132 = arith.mulf %130, %131 : vector<8x256xf32>
    %c255_i32_61 = arith.constant 255 : i32
    %133 = tpu.dynamic_rotate %120 by %c255_i32_61 dim 1 : vector<8x256xf32>, i32 -> vector<8x256xf32>
    %134 = vector.broadcast %4 : vector<1x256xf32> to vector<8x256xf32>
    %135 = arith.mulf %133, %134 : vector<8x256xf32>
    %c241_i32_62 = arith.constant 241 : i32
    %136 = tpu.dynamic_rotate %120 by %c241_i32_62 dim 1 : vector<8x256xf32>, i32 -> vector<8x256xf32>
    %137 = vector.broadcast %5 : vector<1x256xf32> to vector<8x256xf32>
    %138 = arith.mulf %136, %137 : vector<8x256xf32>
    %c240_i32_63 = arith.constant 240 : i32
    %139 = tpu.dynamic_rotate %120 by %c240_i32_63 dim 1 : vector<8x256xf32>, i32 -> vector<8x256xf32>
    %140 = vector.broadcast %6 : vector<1x256xf32> to vector<8x256xf32>
    %141 = arith.mulf %139, %140 : vector<8x256xf32>
    %c239_i32_64 = arith.constant 239 : i32
    %142 = tpu.dynamic_rotate %120 by %c239_i32_64 dim 1 : vector<8x256xf32>, i32 -> vector<8x256xf32>
    %143 = vector.broadcast %7 : vector<1x256xf32> to vector<8x256xf32>
    %144 = arith.mulf %142, %143 : vector<8x256xf32>
    %145 = tpu.concatenate %123, %126, %129, %132, %120, %135, %138, %141, %144 in 0 : vector<8x256xf32>, vector<8x256xf32>, vector<8x256xf32>, vector<8x256xf32>, vector<8x256xf32>, vector<8x256xf32>, vector<8x256xf32>, vector<8x256xf32>, vector<8x256xf32> -> vector<72x256xf32>
    %c216 = arith.constant 216 : index
    %c0_65 = arith.constant 0 : index
    %146 = vector.load %arg14[%c216, %c0_65] : memref<360x256xf32, #tpu.memory_space<vmem>>, vector<72x256xf32>
    tpu.vector_store %arg14[%c216, %c0_65], %145 {strides = array<i32>} : memref<360x256xf32, #tpu.memory_space<vmem>>, vector<72x256xf32>,
    %c0_66 = arith.constant 0 : index
    %c0_67 = arith.constant 0 : index
    %147 = vector.load %arg14[%c0_66, %c0_67] : memref<360x256xf32, #tpu.memory_space<vmem>>, vector<288x256xf32>
    %c0_68 = arith.constant 0 : index
    %c0_69 = arith.constant 0 : index
    %148 = vector.load %arg6[%c0_68, %c0_69] : memref<8x288xf32, #tpu.memory_space<vmem>>, vector<8x288xf32>
    %cst_70 = arith.constant dense<0.000000e+00> : vector<8x256xf32>
    %149 = tpu.matmul %148, %147, %cst_70 {dimension_numbers = #tpu.dot_dimension_numbers<[1], [0], [0], [1], [0, 0, 1, 1], [], []>} : vector<8x288xf32>, vector<288x256xf32>, vector<8x256xf32> -> vector<8x256xf32>
    %c0_71 = arith.constant 0 : index
    %c0_72 = arith.constant 0 : index
    %150 = vector.load %arg11[%c0_71, %c0_72] : memref<8x1xf32, #tpu.memory_space<vmem>>, vector<8x1xf32>
    %151 = vector.broadcast %150 : vector<8x1xf32> to vector<8x256xf32>
    %152 = arith.addf %149, %151 : vector<8x256xf32>
    %cst_73 = arith.constant 0.000000e+00 : f32
    %153 = vector.broadcast %cst_73 : f32 to vector<8x256xf32>
    %154 = arith.cmpf oge, %152, %153 : vector<8x256xf32>
    %cst_74 = arith.constant 2.000000e-01 : f32
    %155 = vector.broadcast %cst_74 : f32 to vector<8x256xf32>
    %156 = arith.mulf %155, %152 : vector<8x256xf32>
    %157 = arith.select %154, %152, %156 : vector<8x256xi1>, vector<8x256xf32>
    %c17_i32_75 = arith.constant 17 : i32
    %158 = tpu.dynamic_rotate %157 by %c17_i32_75 dim 1 : vector<8x256xf32>, i32 -> vector<8x256xf32>
    %159 = vector.broadcast %0 : vector<1x256xf32> to vector<8x256xf32>
    %160 = arith.mulf %158, %159 : vector<8x256xf32>
    %c16_i32_76 = arith.constant 16 : i32
    %161 = tpu.dynamic_rotate %157 by %c16_i32_76 dim 1 : vector<8x256xf32>, i32 -> vector<8x256xf32>
    %162 = vector.broadcast %1 : vector<1x256xf32> to vector<8x256xf32>
    %163 = arith.mulf %161, %162 : vector<8x256xf32>
    %c15_i32_77 = arith.constant 15 : i32
    %164 = tpu.dynamic_rotate %157 by %c15_i32_77 dim 1 : vector<8x256xf32>, i32 -> vector<8x256xf32>
    %165 = vector.broadcast %2 : vector<1x256xf32> to vector<8x256xf32>
    %166 = arith.mulf %164, %165 : vector<8x256xf32>
    %c1_i32_78 = arith.constant 1 : i32
    %167 = tpu.dynamic_rotate %157 by %c1_i32_78 dim 1 : vector<8x256xf32>, i32 -> vector<8x256xf32>
    %168 = vector.broadcast %3 : vector<1x256xf32> to vector<8x256xf32>
    %169 = arith.mulf %167, %168 : vector<8x256xf32>
    %c255_i32_79 = arith.constant 255 : i32
    %170 = tpu.dynamic_rotate %157 by %c255_i32_79 dim 1 : vector<8x256xf32>, i32 -> vector<8x256xf32>
    %171 = vector.broadcast %4 : vector<1x256xf32> to vector<8x256xf32>
    %172 = arith.mulf %170, %171 : vector<8x256xf32>
    %c241_i32_80 = arith.constant 241 : i32
    %173 = tpu.dynamic_rotate %157 by %c241_i32_80 dim 1 : vector<8x256xf32>, i32 -> vector<8x256xf32>
    %174 = vector.broadcast %5 : vector<1x256xf32> to vector<8x256xf32>
    %175 = arith.mulf %173, %174 : vector<8x256xf32>
    %c240_i32_81 = arith.constant 240 : i32
    %176 = tpu.dynamic_rotate %157 by %c240_i32_81 dim 1 : vector<8x256xf32>, i32 -> vector<8x256xf32>
    %177 = vector.broadcast %6 : vector<1x256xf32> to vector<8x256xf32>
    %178 = arith.mulf %176, %177 : vector<8x256xf32>
    %c239_i32_82 = arith.constant 239 : i32
    %179 = tpu.dynamic_rotate %157 by %c239_i32_82 dim 1 : vector<8x256xf32>, i32 -> vector<8x256xf32>
    %180 = vector.broadcast %7 : vector<1x256xf32> to vector<8x256xf32>
    %181 = arith.mulf %179, %180 : vector<8x256xf32>
    %182 = tpu.concatenate %160, %163, %166, %169, %157, %172, %175, %178, %181 in 0 : vector<8x256xf32>, vector<8x256xf32>, vector<8x256xf32>, vector<8x256xf32>, vector<8x256xf32>, vector<8x256xf32>, vector<8x256xf32>, vector<8x256xf32>, vector<8x256xf32> -> vector<72x256xf32>
    %c288 = arith.constant 288 : index
    %c0_83 = arith.constant 0 : index
    %183 = vector.load %arg14[%c288, %c0_83] : memref<360x256xf32, #tpu.memory_space<vmem>>, vector<72x256xf32>
    tpu.vector_store %arg14[%c288, %c0_83], %182 {strides = array<i32>} : memref<360x256xf32, #tpu.memory_space<vmem>>, vector<72x256xf32>,
    %c0_84 = arith.constant 0 : index
    %c0_85 = arith.constant 0 : index
    %184 = vector.load %arg14[%c0_84, %c0_85] : memref<360x256xf32, #tpu.memory_space<vmem>>, vector<360x256xf32>
    %c0_86 = arith.constant 0 : index
    %c0_87 = arith.constant 0 : index
    %185 = vector.load %arg7[%c0_86, %c0_87] : memref<8x360xf32, #tpu.memory_space<vmem>>, vector<8x360xf32>
    %cst_88 = arith.constant dense<0.000000e+00> : vector<8x256xf32>
    %186 = tpu.matmul %185, %184, %cst_88 {dimension_numbers = #tpu.dot_dimension_numbers<[1], [0], [0], [1], [0, 0, 1, 1], [], []>} : vector<8x360xf32>, vector<360x256xf32>, vector<8x256xf32> -> vector<8x256xf32>
    %c0_89 = arith.constant 0 : index
    %c0_90 = arith.constant 0 : index
    %187 = vector.load %arg12[%c0_89, %c0_90] : memref<8x1xf32, #tpu.memory_space<vmem>>, vector<8x1xf32>
    %188 = vector.broadcast %187 : vector<8x1xf32> to vector<8x256xf32>
    %189 = arith.addf %186, %188 : vector<8x256xf32>
    %c0_91 = arith.constant 0 : index
    %c0_92 = arith.constant 0 : index
    %c0_93 = arith.constant 0 : index
    %190 = vector.load %arg13[%c0_91, %c0_92, %c0_93] : memref<1x8x256xf32, #tpu.memory_space<vmem>>, vector<1x8x256xf32>
    %191 = vector.shape_cast %190 : vector<1x8x256xf32> to vector<8x256xf32>
    %192 = vector.shape_cast %189 : vector<8x256xf32> to vector<1x8x256xf32>
    tpu.vector_store %arg13[%c0_91, %c0_92, %c0_93], %192 {strides = array<i32>} : memref<1x8x256xf32, #tpu.memory_space<vmem>>, vector<1x8x256xf32>,
    return
  }
  func.func @transform_0(%arg0: i32) -> (i32, i32, i32) {
    %c0_i32 = arith.constant 0 : i32
    %c0_i32_0 = arith.constant 0 : i32
    %c0_i32_1 = arith.constant 0 : i32
    return %arg0, %c0_i32, %c0_i32_0 : i32, i32, i32
  }
  func.func @transform_1(%arg0: i32) -> (i32, i32) {
    %c0_i32 = arith.constant 0 : i32
    %c0_i32_0 = arith.constant 0 : i32
    %c0_i32_1 = arith.constant 0 : i32
    return %c0_i32, %c0_i32_0 : i32, i32
  }
  func.func @transform_2(%arg0: i32) -> (i32, i32) {
    %c0_i32 = arith.constant 0 : i32
    %c0_i32_0 = arith.constant 0 : i32
    %c0_i32_1 = arith.constant 0 : i32
    return %c0_i32, %c0_i32_0 : i32, i32
  }
  func.func @transform_3(%arg0: i32) -> (i32, i32) {
    %c0_i32 = arith.constant 0 : i32
    %c0_i32_0 = arith.constant 0 : i32
    %c0_i32_1 = arith.constant 0 : i32
    return %c0_i32, %c0_i32_0 : i32, i32
  }
  func.func @transform_4(%arg0: i32) -> (i32, i32) {
    %c0_i32 = arith.constant 0 : i32
    %c0_i32_0 = arith.constant 0 : i32
    %c0_i32_1 = arith.constant 0 : i32
    return %c0_i32, %c0_i32_0 : i32, i32
  }
  func.func @transform_5(%arg0: i32) -> (i32, i32) {
    %c0_i32 = arith.constant 0 : i32
    %c0_i32_0 = arith.constant 0 : i32
    %c0_i32_1 = arith.constant 0 : i32
    return %c0_i32, %c0_i32_0 : i32, i32
  }
  func.func @transform_6(%arg0: i32) -> (i32, i32) {
    %c0_i32 = arith.constant 0 : i32
    %c0_i32_0 = arith.constant 0 : i32
    %c0_i32_1 = arith.constant 0 : i32
    return %c0_i32, %c0_i32_0 : i32, i32
  }
  func.func @transform_7(%arg0: i32) -> (i32, i32) {
    %c0_i32 = arith.constant 0 : i32
    %c0_i32_0 = arith.constant 0 : i32
    %c0_i32_1 = arith.constant 0 : i32
    return %c0_i32, %c0_i32_0 : i32, i32
  }
  func.func @transform_8(%arg0: i32) -> (i32, i32) {
    %c0_i32 = arith.constant 0 : i32
    %c0_i32_0 = arith.constant 0 : i32
    %c0_i32_1 = arith.constant 0 : i32
    return %c0_i32, %c0_i32_0 : i32, i32
  }
  func.func @transform_9(%arg0: i32) -> (i32, i32) {
    %c0_i32 = arith.constant 0 : i32
    %c0_i32_0 = arith.constant 0 : i32
    %c0_i32_1 = arith.constant 0 : i32
    return %c0_i32, %c0_i32_0 : i32, i32
  }
  func.func @transform_10(%arg0: i32) -> (i32, i32) {
    %c0_i32 = arith.constant 0 : i32
    %c0_i32_0 = arith.constant 0 : i32
    %c0_i32_1 = arith.constant 0 : i32
    return %c0_i32, %c0_i32_0 : i32, i32
  }
  func.func @transform_11(%arg0: i32) -> (i32, i32) {
    %c0_i32 = arith.constant 0 : i32
    %c0_i32_0 = arith.constant 0 : i32
    %c0_i32_1 = arith.constant 0 : i32
    return %c0_i32, %c0_i32_0 : i32, i32
  }
  func.func @transform_12(%arg0: i32) -> (i32, i32, i32) {
    %c0_i32 = arith.constant 0 : i32
    %c0_i32_0 = arith.constant 0 : i32
    %c0_i32_1 = arith.constant 0 : i32
    return %arg0, %c0_i32, %c0_i32_0 : i32, i32, i32
  }
}

</mosaic_0001>

<llo_original>
// kernel: dense_block.1
$region0: #{dense_block.1}
  #allocation0 [shape = 'u32[]', space=smem, size = 0x4, offset = 0x4, fixed_abs, tag = 'smem constant byte address 0x4 - core index']
  #allocation1 [shape = 'u32[72,128]{1,0:T(1,128)}', space=vmem, size = 0x9000, scoped, tag = 'internal scratch']
  #allocation2 [shape = 'f32[360,256]{1,0:T(8,128)}', space=vmem, size = 0x5a000, scoped, tag = 'scratch operand']
  %s0 = inlined_call_operand.vmem [shape: f32[2,8,256], index: 0, kind: input, shape index: {}]
  %s1 = inlined_call_operand.vmem [shape: f32[9,256], index: 1, kind: input, shape index: {}]
  %s2 = inlined_call_operand.vmem [shape: f32[8,72], index: 2, kind: input, shape index: {}]
  %s3 = inlined_call_operand.vmem [shape: f32[8,144], index: 3, kind: input, shape index: {}]
  %s4 = inlined_call_operand.vmem [shape: f32[8,216], index: 4, kind: input, shape index: {}]
  %s5 = inlined_call_operand.vmem [shape: f32[8,288], index: 5, kind: input, shape index: {}]
  %s6 = inlined_call_operand.vmem [shape: f32[8,360], index: 6, kind: input, shape index: {}]
  %s7 = inlined_call_operand.vmem [shape: f32[8,1], index: 7, kind: input, shape index: {}]
  %s8 = inlined_call_operand.vmem [shape: f32[8,1], index: 8, kind: input, shape index: {}]
  %s9 = inlined_call_operand.vmem [shape: f32[8,1], index: 9, kind: input, shape index: {}]
  %s10 = inlined_call_operand.vmem [shape: f32[8,1], index: 10, kind: input, shape index: {}]
  %s11 = inlined_call_operand.vmem [shape: f32[8,1], index: 11, kind: input, shape index: {}]
  %s12 = inlined_call_operand.vmem [shape: f32[2,8,256], index: 12, kind: output, shape index: {}]
  %s13 = sld [smem:[#allocation0]]
  $region81: #{dense_block.1} parent=0
    _
  %s15 = ssub.s32 1, %s13
  %s16 = scalar_select 0, %s15, %s13
  loop: start=0, step=1, limit=4
  $region2: #{dense_block.1} parent=0 // loop_pre_header
    _
  $region3: #{dense_block.1} parent=0 // loop_header
    %s18 = sphi 0, %s22
    %p19 = scmp.ge.s32.totalorder %s18, 4
    %s28 = sphi 0, %s30
    %s31 = sphi 0, %s28
    %s32 = sphi 0, %s31
    %s48 = sphi 0, %s32
    %s52 = sphi 0, %s52
    %s54 = sphi 0, %s52
    %s55 = sphi 0, %s54
    %s69 = sphi 0, %s55
    %s73 = sphi 0, %s73
    %s75 = sphi 0, %s73
    %s76 = sphi 0, %s75
    %s90 = sphi 0, %s76
    %s94 = sphi 0, %s94
    %s96 = sphi 0, %s94
    %s97 = sphi 0, %s96
    %s111 = sphi 0, %s97
    %s115 = sphi 0, %s115
    %s117 = sphi 0, %s115
    %s118 = sphi 0, %s117
    %s132 = sphi 0, %s118
    %s136 = sphi 0, %s136
    %s138 = sphi 0, %s136
    %s139 = sphi 0, %s138
    %s153 = sphi 0, %s139
    %s157 = sphi 0, %s157
    %s159 = sphi 0, %s157
    %s160 = sphi 0, %s159
    %s174 = sphi 0, %s160
    %s178 = sphi 0, %s178
    %s180 = sphi 0, %s178
    %s181 = sphi 0, %s180
    %s195 = sphi 0, %s181
    %s199 = sphi 0, %s199
    %s201 = sphi 0, %s199
    %s202 = sphi 0, %s201
    %s216 = sphi 0, %s202
    %s220 = sphi 0, %s220
    %s222 = sphi 0, %s220
    %s223 = sphi 0, %s222
    %s237 = sphi 0, %s223
    %s241 = sphi 0, %s241
    %s243 = sphi 0, %s241
    %s244 = sphi 0, %s243
    %s258 = sphi 0, %s244
    %s262 = sphi 0, %s262
    %s264 = sphi 0, %s262
    %s265 = sphi 0, %s264
    %s279 = sphi 0, %s265
    %s285 = sphi 0, %s287
    %s288 = sphi 0, %s285
    %s289 = sphi 0, %s288
    %s305 = sphi 0, %s289
  $region4: #{dense_block.1} parent=0 // loop_header_branch
    %21 = sbr.rel (%p19) target = $region8
  $region5: #{dense_block.1} parent=0 // loop_body
    %s23 = ssub.s32 %s18, 1
    %s24 = ssub.s32 %s18, 2
    %s25 = sadd.s32 %s18, 1
    %s26 = ssub.s32 %s18, %s25
    %p27 = scmp.eq.s32.totalorder %s26, 0
    %s29 = sadd.s32 %s28, 1
    %s30 = scalar_select %p27, %s28, %s29
    %p33 = pneg %p27
    %p34 = scmp.eq.s32.totalorder %s18, 1
    %p35 = por %p33, %p34
    %p36 = scmp.ne.s32.totalorder %s28, %s31
    %p37 = scmp.eq.s32.totalorder %s18, 0
    %p38 = por %p36, %p37
    %p39 = scmp.ne.s32.totalorder %s28, %s31
    %p40 = scmp.eq.s32.totalorder %s23, 1
    %p41 = por %p39, %p40
    %p42 = scmp.ne.s32.totalorder %s31, %s32
    %p43 = scmp.eq.s32.totalorder %s23, 0
    %p44 = por %p42, %p43
    %p45 = scmp.ne.s32.totalorder %s31, %s32
    %p46 = scmp.eq.s32.totalorder %s24, 1
    %p47 = por %p45, %p46
    %p49 = scmp.ne.s32.totalorder %s32, %s48
    %p50 = scmp.eq.s32.totalorder %s24, 0
    %p51 = por %p49, %p50
    %s53 = sadd.s32 %s52, 1
    %p56 = scmp.eq.s32.totalorder %s18, 1
    %p57 = scmp.ne.s32.totalorder %s52, %s54
    %p58 = scmp.eq.s32.totalorder %s18, 0
    %p59 = por %p57, %p58
    %p60 = scmp.ne.s32.totalorder %s52, %s54
    %p61 = scmp.eq.s32.totalorder %s23, 1
    %p62 = por %p60, %p61
    %p63 = scmp.ne.s32.totalorder %s54, %s55
    %p64 = scmp.eq.s32.totalorder %s23, 0
    %p65 = por %p63, %p64
    %p66 = scmp.ne.s32.totalorder %s54, %s55
    %p67 = scmp.eq.s32.totalorder %s24, 1
    %p68 = por %p66, %p67
    %p70 = scmp.ne.s32.totalorder %s55, %s69
    %p71 = scmp.eq.s32.totalorder %s24, 0
    %p72 = por %p70, %p71
    %s74 = sadd.s32 %s73, 1
    %p77 = scmp.eq.s32.totalorder %s18, 1
    %p78 = scmp.ne.s32.totalorder %s73, %s75
    %p79 = scmp.eq.s32.totalorder %s18, 0
    %p80 = por %p78, %p79
    %p81 = scmp.ne.s32.totalorder %s73, %s75
    %p82 = scmp.eq.s32.totalorder %s23, 1
    %p83 = por %p81, %p82
    %p84 = scmp.ne.s32.totalorder %s75, %s76
    %p85 = scmp.eq.s32.totalorder %s23, 0
    %p86 = por %p84, %p85
    %p87 = scmp.ne.s32.totalorder %s75, %s76
    %p88 = scmp.eq.s32.totalorder %s24, 1
    %p89 = por %p87, %p88
    %p91 = scmp.ne.s32.totalorder %s76, %s90
    %p92 = scmp.eq.s32.totalorder %s24, 0
    %p93 = por %p91, %p92
    %s95 = sadd.s32 %s94, 1
    %p98 = scmp.eq.s32.totalorder %s18, 1
    %p99 = scmp.ne.s32.totalorder %s94, %s96
    %p100 = scmp.eq.s32.totalorder %s18, 0
    %p101 = por %p99, %p100
    %p102 = scmp.ne.s32.totalorder %s94, %s96
    %p103 = scmp.eq.s32.totalorder %s23, 1
    %p104 = por %p102, %p103
    %p105 = scmp.ne.s32.totalorder %s96, %s97
    %p106 = scmp.eq.s32.totalorder %s23, 0
    %p107 = por %p105, %p106
    %p108 = scmp.ne.s32.totalorder %s96, %s97
    %p109 = scmp.eq.s32.totalorder %s24, 1
    %p110 = por %p108, %p109
    %p112 = scmp.ne.s32.totalorder %s97, %s111
    %p113 = scmp.eq.s32.totalorder %s24, 0
    %p114 = por %p112, %p113
    %s116 = sadd.s32 %s115, 1
    %p119 = scmp.eq.s32.totalorder %s18, 1
    %p120 = scmp.ne.s32.totalorder %s115, %s117
    %p121 = scmp.eq.s32.totalorder %s18, 0
    %p122 = por %p120, %p121
    %p123 = scmp.ne.s32.totalorder %s115, %s117
    %p124 = scmp.eq.s32.totalorder %s23, 1
    %p125 = por %p123, %p124
    %p126 = scmp.ne.s32.totalorder %s117, %s118
    %p127 = scmp.eq.s32.totalorder %s23, 0
    %p128 = por %p126, %p127
    %p129 = scmp.ne.s32.totalorder %s117, %s118
    %p130 = scmp.eq.s32.totalorder %s24, 1
    %p131 = por %p129, %p130
    %p133 = scmp.ne.s32.totalorder %s118, %s132
    %p134 = scmp.eq.s32.totalorder %s24, 0
    %p135 = por %p133, %p134
    %s137 = sadd.s32 %s136, 1
    %p140 = scmp.eq.s32.totalorder %s18, 1
    %p141 = scmp.ne.s32.totalorder %s136, %s138
    %p142 = scmp.eq.s32.totalorder %s18, 0
    %p143 = por %p141, %p142
    %p144 = scmp.ne.s32.totalorder %s136, %s138
    %p145 = scmp.eq.s32.totalorder %s23, 1
    %p146 = por %p144, %p145
    %p147 = scmp.ne.s32.totalorder %s138, %s139
    %p148 = scmp.eq.s32.totalorder %s23, 0
    %p149 = por %p147, %p148
    %p150 = scmp.ne.s32.totalorder %s138, %s139
    %p151 = scmp.eq.s32.totalorder %s24, 1
    %p152 = por %p150, %p151
    %p154 = scmp.ne.s32.totalorder %s139, %s153
    %p155 = scmp.eq.s32.totalorder %s24, 0
    %p156 = por %p154, %p155
    %s158 = sadd.s32 %s157, 1
    %p161 = scmp.eq.s32.totalorder %s18, 1
    %p162 = scmp.ne.s32.totalorder %s157, %s159
    %p163 = scmp.eq.s32.totalorder %s18, 0
    %p164 = por %p162, %p163
    %p165 = scmp.ne.s32.totalorder %s157, %s159
    %p166 = scmp.eq.s32.totalorder %s23, 1
    %p167 = por %p165, %p166
    %p168 = scmp.ne.s32.totalorder %s159, %s160
    %p169 = scmp.eq.s32.totalorder %s23, 0
    %p170 = por %p168, %p169
    %p171 = scmp.ne.s32.totalorder %s159, %s160
    %p172 = scmp.eq.s32.totalorder %s24, 1
    %p173 = por %p171, %p172
    %p175 = scmp.ne.s32.totalorder %s160, %s174
    %p176 = scmp.eq.s32.totalorder %s24, 0
    %p177 = por %p175, %p176
    %s179 = sadd.s32 %s178, 1
    %p182 = scmp.eq.s32.totalorder %s18, 1
    %p183 = scmp.ne.s32.totalorder %s178, %s180
    %p184 = scmp.eq.s32.totalorder %s18, 0
    %p185 = por %p183, %p184
    %p186 = scmp.ne.s32.totalorder %s178, %s180
    %p187 = scmp.eq.s32.totalorder %s23, 1
    %p188 = por %p186, %p187
    %p189 = scmp.ne.s32.totalorder %s180, %s181
    %p190 = scmp.eq.s32.totalorder %s23, 0
    %p191 = por %p189, %p190
    %p192 = scmp.ne.s32.totalorder %s180, %s181
    %p193 = scmp.eq.s32.totalorder %s24, 1
    %p194 = por %p192, %p193
    %p196 = scmp.ne.s32.totalorder %s181, %s195
    %p197 = scmp.eq.s32.totalorder %s24, 0
    %p198 = por %p196, %p197
    %s200 = sadd.s32 %s199, 1
    %p203 = scmp.eq.s32.totalorder %s18, 1
    %p204 = scmp.ne.s32.totalorder %s199, %s201
    %p205 = scmp.eq.s32.totalorder %s18, 0
    %p206 = por %p204, %p205
    %p207 = scmp.ne.s32.totalorder %s199, %s201
    %p208 = scmp.eq.s32.totalorder %s23, 1
    %p209 = por %p207, %p208
    %p210 = scmp.ne.s32.totalorder %s201, %s202
    %p211 = scmp.eq.s32.totalorder %s23, 0
    %p212 = por %p210, %p211
    %p213 = scmp.ne.s32.totalorder %s201, %s202
    %p214 = scmp.eq.s32.totalorder %s24, 1
    %p215 = por %p213, %p214
    %p217 = scmp.ne.s32.totalorder %s202, %s216
    %p218 = scmp.eq.s32.totalorder %s24, 0
    %p219 = por %p217, %p218
    %s221 = sadd.s32 %s220, 1
    %p224 = scmp.eq.s32.totalorder %s18, 1
    %p225 = scmp.ne.s32.totalorder %s220, %s222
    %p226 = scmp.eq.s32.totalorder %s18, 0
    %p227 = por %p225, %p226
    %p228 = scmp.ne.s32.totalorder %s220, %s222
    %p229 = scmp.eq.s32.totalorder %s23, 1
    %p230 = por %p228, %p229
    %p231 = scmp.ne.s32.totalorder %s222, %s223
    %p232 = scmp.eq.s32.totalorder %s23, 0
    %p233 = por %p231, %p232
    %p234 = scmp.ne.s32.totalorder %s222, %s223
    %p235 = scmp.eq.s32.totalorder %s24, 1
    %p236 = por %p234, %p235
    %p238 = scmp.ne.s32.totalorder %s223, %s237
    %p239 = scmp.eq.s32.totalorder %s24, 0
    %p240 = por %p238, %p239
    %s242 = sadd.s32 %s241, 1
    %p245 = scmp.eq.s32.totalorder %s18, 1
    %p246 = scmp.ne.s32.totalorder %s241, %s243
    %p247 = scmp.eq.s32.totalorder %s18, 0
    %p248 = por %p246, %p247
    %p249 = scmp.ne.s32.totalorder %s241, %s243
    %p250 = scmp.eq.s32.totalorder %s23, 1
    %p251 = por %p249, %p250
    %p252 = scmp.ne.s32.totalorder %s243, %s244
    %p253 = scmp.eq.s32.totalorder %s23, 0
    %p254 = por %p252, %p253
    %p255 = scmp.ne.s32.totalorder %s243, %s244
    %p256 = scmp.eq.s32.totalorder %s24, 1
    %p257 = por %p255, %p256
    %p259 = scmp.ne.s32.totalorder %s244, %s258
    %p260 = scmp.eq.s32.totalorder %s24, 0
    %p261 = por %p259, %p260
    %s263 = sadd.s32 %s262, 1
    %p266 = scmp.eq.s32.totalorder %s18, 1
    %p267 = scmp.ne.s32.totalorder %s262, %s264
    %p268 = scmp.eq.s32.totalorder %s18, 0
    %p269 = por %p267, %p268
    %p270 = scmp.ne.s32.totalorder %s262, %s264
    %p271 = scmp.eq.s32.totalorder %s23, 1
    %p272 = por %p270, %p271
    %p273 = scmp.ne.s32.totalorder %s264, %s265
    %p274 = scmp.eq.s32.totalorder %s23, 0
    %p275 = por %p273, %p274
    %p276 = scmp.ne.s32.totalorder %s264, %s265
    %p277 = scmp.eq.s32.totalorder %s24, 1
    %p278 = por %p276, %p277
    %p280 = scmp.ne.s32.totalorder %s265, %s279
    %p281 = scmp.eq.s32.totalorder %s24, 0
    %p282 = por %p280, %p281
    %s283 = ssub.s32 %s18, %s25
    %p284 = scmp.eq.s32.totalorder %s283, 0
    %s286 = sadd.s32 %s285, 1
    %s287 = scalar_select %p284, %s285, %s286
    %p290 = pneg %p284
    %p291 = scmp.eq.s32.totalorder %s18, 1
    %p292 = por %p290, %p291
    %p293 = scmp.ne.s32.totalorder %s285, %s288
    %p294 = scmp.eq.s32.totalorder %s18, 0
    %p295 = por %p293, %p294
    %p296 = scmp.ne.s32.totalorder %s285, %s288
    %p297 = scmp.eq.s32.totalorder %s23, 1
    %p298 = por %p296, %p297
    %p299 = scmp.ne.s32.totalorder %s288, %s289
    %p300 = scmp.eq.s32.totalorder %s23, 0
    %p301 = por %p299, %p300
    %p302 = scmp.ne.s32.totalorder %s288, %s289
    %p303 = scmp.eq.s32.totalorder %s24, 1
    %p304 = por %p302, %p303
    %p306 = scmp.ne.s32.totalorder %s289, %s305
    %p307 = scmp.eq.s32.totalorder %s24, 0
    %p308 = por %p306, %p307
    %p309 = scmp.le.s32.totalorder 1, %s18
    %p310 = scmp.lt.s32.totalorder %s18, 3
    %p311 = pnand %p309, %p310
    %p312 = pneg %p311
    // Predicated region
    $region9: #{dense_block.1} parent=5 // pred_check
      _
    $region10: #{dense_block.1} parent=5 // pred_check_branch
      %314 = sbr.rel (%p311) target = $region12
    $region11: #{dense_block.1} parent=5 // pred_region
      %s315 = ssub.s32 %s18, 1
      // Predicated region
      $region13: #{dense_block.1} parent=11 // pred_check
        %p316 = pneg %p65
      $region14: #{dense_block.1} parent=11 // pred_check_branch
        %318 = sbr.rel (%p316) target = $region16
      $region15: #{dense_block.1} parent=11 // pred_region
        _
      $region16: #{dense_block.1} parent=11 // pred_fallthru
        _
      // Predicated region
      $region17: #{dense_block.1} parent=11 // pred_check
        %p319 = pneg %p86
      $region18: #{dense_block.1} parent=11 // pred_check_branch
        %321 = sbr.rel (%p319) target = $region20
      $region19: #{dense_block.1} parent=11 // pred_region
        _
      $region20: #{dense_block.1} parent=11 // pred_fallthru
        _
      // Predicated region
      $region21: #{dense_block.1} parent=11 // pred_check
        %p322 = pneg %p107
      $region22: #{dense_block.1} parent=11 // pred_check_branch
        %324 = sbr.rel (%p322) target = $region24
      $region23: #{dense_block.1} parent=11 // pred_region
        _
      $region24: #{dense_block.1} parent=11 // pred_fallthru
        _
      // Predicated region
      $region25: #{dense_block.1} parent=11 // pred_check
        %p325 = pneg %p128
      $region26: #{dense_block.1} parent=11 // pred_check_branch
        %327 = sbr.rel (%p325) target = $region28
      $region27: #{dense_block.1} parent=11 // pred_region
        _
      $region28: #{dense_block.1} parent=11 // pred_fallthru
        _
      // Predicated region
      $region29: #{dense_block.1} parent=11 // pred_check
        %p328 = pneg %p149
      $region30: #{dense_block.1} parent=11 // pred_check_branch
        %330 = sbr.rel (%p328) target = $region32
      $region31: #{dense_block.1} parent=11 // pred_region
        _
      $region32: #{dense_block.1} parent=11 // pred_fallthru
        _
      // Predicated region
      $region33: #{dense_block.1} parent=11 // pred_check
        %p331 = pneg %p170
      $region34: #{dense_block.1} parent=11 // pred_check_branch
        %333 = sbr.rel (%p331) target = $region36
      $region35: #{dense_block.1} parent=11 // pred_region
        _
      $region36: #{dense_block.1} parent=11 // pred_fallthru
        _
      // Predicated region
      $region37: #{dense_block.1} parent=11 // pred_check
        %p334 = pneg %p191
      $region38: #{dense_block.1} parent=11 // pred_check_branch
        %336 = sbr.rel (%p334) target = $region40
      $region39: #{dense_block.1} parent=11 // pred_region
        _
      $region40: #{dense_block.1} parent=11 // pred_fallthru
        _
      // Predicated region
      $region41: #{dense_block.1} parent=11 // pred_check
        %p337 = pneg %p212
      $region42: #{dense_block.1} parent=11 // pred_check_branch
        %339 = sbr.rel (%p337) target = $region44
      $region43: #{dense_block.1} parent=11 // pred_region
        _
      $region44: #{dense_block.1} parent=11 // pred_fallthru
        _
      // Predicated region
      $region45: #{dense_block.1} parent=11 // pred_check
        %p340 = pneg %p233
      $region46: #{dense_block.1} parent=11 // pred_check_branch
        %342 = sbr.rel (%p340) target = $region48
      $region47: #{dense_block.1} parent=11 // pred_region
        _
      $region48: #{dense_block.1} parent=11 // pred_fallthru
        _
      // Predicated region
      $region49: #{dense_block.1} parent=11 // pred_check
        %p343 = pneg %p254
      $region50: #{dense_block.1} parent=11 // pred_check_branch
        %345 = sbr.rel (%p343) target = $region52
      $region51: #{dense_block.1} parent=11 // pred_region
        _
      $region52: #{dense_block.1} parent=11 // pred_fallthru
        _
      // Predicated region
      $region53: #{dense_block.1} parent=11 // pred_check
        %p346 = pneg %p275
      $region54: #{dense_block.1} parent=11 // pred_check_branch
        %348 = sbr.rel (%p346) target = $region56
      $region55: #{dense_block.1} parent=11 // pred_region
        _
      $region56: #{dense_block.1} parent=11 // pred_fallthru
        _
    $region12: #{dense_block.1} parent=5 // pred_fallthru
      _
    %p349 = scmp.lt.s32.totalorder %s18, 2
    // Predicated region
    $region57: #{dense_block.1} parent=5 // pred_check
      %p350 = pneg %p349
    $region58: #{dense_block.1} parent=5 // pred_check_branch
      %352 = sbr.rel (%p350) target = $region60
    $region59: #{dense_block.1} parent=5 // pred_region
      // Predicated region
      $region61: #{dense_block.1} parent=59 // pred_check
        %p353 = pneg %p38
      $region62: #{dense_block.1} parent=59 // pred_check_branch
        %355 = sbr.rel (%p353) target = $region64
      $region63: #{dense_block.1} parent=59 // pred_region
        %p356 = scmp.lt.s32.totalorder %s18, 1
        %s357 = scalar_select %p356, %s18, 1
        %s358 = smul.addr %s357, 2
        %s359 = smul.addr %s358, 8
        %s360 = scalar_lea.vmem %s0, %s359
      $region64: #{dense_block.1} parent=59 // pred_fallthru
        _
    $region60: #{dense_block.1} parent=5 // pred_fallthru
      _
    %p361 = scmp.le.s32.totalorder 1, %s18
    %p362 = scmp.lt.s32.totalorder %s18, 3
    %p363 = pnand %p361, %p362
    %p364 = pneg %p363
    // Predicated region
    $region65: #{dense_block.1} parent=5 // pred_check
      _
    $region66: #{dense_block.1} parent=5 // pred_check_branch
      %366 = sbr.rel (%p363) target = $region68
    $region67: #{dense_block.1} parent=5 // pred_region
      %s367 = ssub.s32 %s18, 1
      %p368 = scmp.lt.s32.totalorder %s23, 1
      %s369 = scalar_select %p368, %s23, 1
      %s370 = smul.addr %s369, 2
      %s371 = smul.addr %s370, 8
      %s372 = scalar_lea.vmem %s0, %s371
      %p373 = pneg %p44
      %p374 = pneg %p41
      %p375 = pneg %p65
      %p376 = pneg %p62
      %p377 = pneg %p86
      %p378 = pneg %p83
      %p379 = pneg %p107
      %p380 = pneg %p104
      %p381 = pneg %p128
      %p382 = pneg %p125
      %p383 = pneg %p149
      %p384 = pneg %p146
      %p385 = pneg %p170
      %p386 = pneg %p167
      %p387 = pneg %p191
      %p388 = pneg %p188
      %p389 = pneg %p212
      %p390 = pneg %p209
      %p391 = pneg %p233
      %p392 = pneg %p230
      %p393 = pneg %p254
      %p394 = pneg %p251
      %p395 = pneg %p275
      %p396 = pneg %p272
      %p397 = pneg %p301
      %p398 = pneg %p298
      %p399 = scmp.lt.s32.totalorder %s23, 1
      %s400 = scalar_select %p399, %s23, 1
      %s401 = smul.addr %s400, 2
      %s402 = smul.addr %s401, 8
      %s403 = scalar_lea.vmem %s12, %s402
      %p404 = scmp.lt.s32.totalorder %s23, 1
      %s405 = scalar_select %p404, %s23, 1
      %s406 = smul.addr %s405, 2
      %s407 = smul.addr %s406, 8
      %s408 = scalar_lea.vmem %s0, %s407
      %p409 = scmp.lt.s32.totalorder %s23, 1
      %s410 = scalar_select %p409, %s23, 1
      %s411 = smul.addr %s410, 2
      %s412 = smul.addr %s411, 8
      %s413 = scalar_lea.vmem %s12, %s412
      %v414 = vld [vmem:[%s1] ss:$8 sm:$0x3]
      %s415 = scalar_lea.vmem %s1, 1
      %v416 = vld [vmem:[%s415] ss:$8 sm:$0x3]
      %s417 = scalar_lea.vmem %s1, 2
      %v418 = vld [vmem:[%s417] ss:$8 sm:$0x3]
      %s419 = scalar_lea.vmem %s1, 3
      %v420 = vld [vmem:[%s419] ss:$8 sm:$0x3]
      %s421 = scalar_lea.vmem %s1, 5
      %v422 = vld [vmem:[%s421] ss:$8 sm:$0x3]
      %s423 = scalar_lea.vmem %s1, 6
      %v424 = vld [vmem:[%s423] ss:$8 sm:$0x3]
      %s425 = scalar_lea.vmem %s1, 7
      %v426 = vld [vmem:[%s425] ss:$8 sm:$0x3]
      %s427 = scalar_lea.vmem %s1, 16
      %v428 = vld [vmem:[%s427] ss:$8 sm:$0x3]
      %v429 = vld [vmem:[%s408] sm:$0xff]
      %v430 = vld [vmem:[%s408 + $0x8] sm:$0xff]
      %431 = vrot.lane.b32.xlu0 %v429, 17
      %v432 = vpop.permute.xlu0 %431
      %433 = vrot.lane.b32.xlu0 %v430, 17
      %v434 = vpop.permute.xlu0 %433
      %v435 = vlaneseq
      %v436 = vand.u32 %v435, 127
      %vm437 = vcmp.lt.s32.totalorder %v436, 17
      %v438 = vsel %vm437, %v432, %v434
      %v439 = vsel %vm437, %v434, %v432
      %v441 = vperm.slane %v414, 0
      %v442 = vperm.slane %v414, 1
      %v445 = vmul.f32 %v439, %v441
      %v446 = vmul.f32 %v438, %v442
      %447 = vrot.lane.b32.xlu0 %v429, 16
      %v448 = vpop.permute.xlu0 %447
      %449 = vrot.lane.b32.xlu0 %v430, 16
      %v450 = vpop.permute.xlu0 %449
      %vm451 = vcmp.lt.s32.totalorder %v436, 16
      %v452 = vsel %vm451, %v448, %v450
      %v453 = vsel %vm451, %v450, %v448
      %v455 = vperm.slane %v416, 0
      %v456 = vperm.slane %v416, 1
      %v459 = vmul.f32 %v453, %v455
      %v460 = vmul.f32 %v452, %v456
      %461 = vrot.lane.b32.xlu0 %v429, 15
      %v462 = vpop.permute.xlu0 %461
      %463 = vrot.lane.b32.xlu0 %v430, 15
      %v464 = vpop.permute.xlu0 %463
      %vm465 = vcmp.lt.s32.totalorder %v436, 15
      %v466 = vsel %vm465, %v462, %v464
      %v467 = vsel %vm465, %v464, %v462
      %v469 = vperm.slane %v418, 0
      %v470 = vperm.slane %v418, 1
      %v473 = vmul.f32 %v467, %v469
      %v474 = vmul.f32 %v466, %v470
      %475 = vrot.lane.b32.xlu0 %v429, 1
      %v476 = vpop.permute.xlu0 %475
      %477 = vrot.lane.b32.xlu0 %v430, 1
      %v478 = vpop.permute.xlu0 %477
      %vm479 = vcmp.lt.s32.totalorder %v436, 1
      %v480 = vsel %vm479, %v476, %v478
      %v481 = vsel %vm479, %v478, %v476
      %v483 = vperm.slane %v420, 0
      %v484 = vperm.slane %v420, 1
      %v487 = vmul.f32 %v481, %v483
      %v488 = vmul.f32 %v480, %v484
      %489 = vrot.lane.b32.xlu0 %v429, 127
      %v490 = vpop.permute.xlu0 %489
      %491 = vrot.lane.b32.xlu0 %v430, 127
      %v492 = vpop.permute.xlu0 %491
      %vm493 = vcmp.lt.s32.totalorder %v436, 127
      %v494 = vsel %vm493, %v490, %v492
      %v495 = vsel %vm493, %v492, %v490
      %v497 = vperm.slane %v422, 0
      %v498 = vperm.slane %v422, 1
      %v501 = vmul.f32 %v494, %v497
      %v502 = vmul.f32 %v495, %v498
      %503 = vrot.lane.b32.xlu0 %v429, 113
      %v504 = vpop.permute.xlu0 %503
      %505 = vrot.lane.b32.xlu0 %v430, 113
      %v506 = vpop.permute.xlu0 %505
      %vm507 = vcmp.lt.s32.totalorder %v436, 113
      %v508 = vsel %vm507, %v504, %v506
      %v509 = vsel %vm507, %v506, %v504
      %v511 = vperm.slane %v424, 0
      %v512 = vperm.slane %v424, 1
      %v515 = vmul.f32 %v508, %v511
      %v516 = vmul.f32 %v509, %v512
      %517 = vrot.lane.b32.xlu0 %v429, 112
      %v518 = vpop.permute.xlu0 %517
      %519 = vrot.lane.b32.xlu0 %v430, 112
      %v520 = vpop.permute.xlu0 %519
      %vm521 = vcmp.lt.s32.totalorder %v436, 112
      %v522 = vsel %vm521, %v518, %v520
      %v523 = vsel %vm521, %v520, %v518
      %v525 = vperm.slane %v426, 0
      %v526 = vperm.slane %v426, 1
      %v529 = vmul.f32 %v522, %v525
      %v530 = vmul.f32 %v523, %v526
      %531 = vrot.lane.b32.xlu0 %v429, 111
      %v532 = vpop.permute.xlu0 %531
      %533 = vrot.lane.b32.xlu0 %v430, 111
      %v534 = vpop.permute.xlu0 %533
      %vm535 = vcmp.lt.s32.totalorder %v436, 111
      %v536 = vsel %vm535, %v532, %v534
      %v537 = vsel %vm535, %v534, %v532
      %v539 = vperm.slane %v428, 0
      %v540 = vperm.slane %v428, 1
      %v543 = vmul.f32 %v536, %v539
      %v544 = vmul.f32 %v537, %v540
      %545 = vst [vmem:[#allocation2] sm:$0xff] %v445
      %546 = vst [vmem:[#allocation2 + $0x8] sm:$0xff] %v446
      %547 = vst [vmem:[#allocation2 + $0x10] sm:$0xff] %v459
      %548 = vst [vmem:[#allocation2 + $0x18] sm:$0xff] %v460
      %549 = vst [vmem:[#allocation2 + $0x20] sm:$0xff] %v473
      %550 = vst [vmem:[#allocation2 + $0x28] sm:$0xff] %v474
      %551 = vst [vmem:[#allocation2 + $0x30] sm:$0xff] %v487
      %552 = vst [vmem:[#allocation2 + $0x38] sm:$0xff] %v488
      %553 = vst [vmem:[#allocation2 + $0x40] sm:$0xff] %v429
      %554 = vst [vmem:[#allocation2 + $0x48] sm:$0xff] %v430
      %555 = vst [vmem:[#allocation2 + $0x50] sm:$0xff] %v501
      %556 = vst [vmem:[#allocation2 + $0x58] sm:$0xff] %v502
      %557 = vst [vmem:[#allocation2 + $0x60] sm:$0xff] %v515
      %558 = vst [vmem:[#allocation2 + $0x68] sm:$0xff] %v516
      %559 = vst [vmem:[#allocation2 + $0x70] sm:$0xff] %v529
      %560 = vst [vmem:[#allocation2 + $0x78] sm:$0xff] %v530
      %561 = vst [vmem:[#allocation2 + $0x80] sm:$0xff] %v543
      %562 = vst [vmem:[#allocation2 + $0x88] sm:$0xff] %v544
      %v563 = vld [vmem:[#allocation2] sm:$0xff]
      %v564 = vld [vmem:[#allocation2 + $0x8] sm:$0xff]
      %v565 = vld [vmem:[#allocation2 + $0x10] sm:$0xff]
      %v566 = vld [vmem:[#allocation2 + $0x18] sm:$0xff]
      %v567 = vld [vmem:[#allocation2 + $0x20] sm:$0xff]
      %v568 = vld [vmem:[#allocation2 + $0x28] sm:$0xff]
      %v569 = vld [vmem:[#allocation2 + $0x30] sm:$0xff]
      %v570 = vld [vmem:[#allocation2 + $0x38] sm:$0xff]
      %v571 = vld [vmem:[#allocation2 + $0x40] sm:$0xff]
      %v572 = vld [vmem:[#allocation2 + $0x48] sm:$0xff]
      %v573 = vld [vmem:[#allocation2 + $0x50] sm:$0xff]
      %v574 = vld [vmem:[#allocation2 + $0x58] sm:$0xff]
      %v575 = vld [vmem:[#allocation2 + $0x60] sm:$0xff]
      %v576 = vld [vmem:[#allocation2 + $0x68] sm:$0xff]
      %v577 = vld [vmem:[#allocation2 + $0x70] sm:$0xff]
      %v578 = vld [vmem:[#allocation2 + $0x78] sm:$0xff]
      %v579 = vld [vmem:[#allocation2 + $0x80] sm:$0xff]
      %v580 = vld [vmem:[#allocation2 + $0x88] sm:$0xff]
      %v581 = vld [vmem:[%s2] sm:$0xff]
      %v582 = vld [vmem:[%s7] sm:$0xff]
      %584 = vset.pattern.permute.xlu0 0
      %585 = vperm.xlu0 %584, %v582
      %v586 = vpop.permute.xlu0 %585
      %vm588 = vcmask 588800
      %v590 = vsel %vm588, %v581, 0
      %592 = vmatpush.msra.mxu0 0.0
      %593 = vmatpush.msra.mxu0 0.0
      %594 = vmatpush.msra.mxu0 0.0
      %595 = vmatpush.msra.mxu0 0.0
      %596 = vmatpush.msra.mxu0 0.0
      %597 = vmatpush.msra.mxu0 0.0
      %598 = vmatpush.msra.mxu0 0.0
      %599 = vmatpush.msra.mxu0 %v579
      %600 = vmatpush.msra.mxu0 %v577
      %601 = vmatpush.msra.mxu0 %v575
      %602 = vmatpush.msra.mxu0 %v573
      %603 = vmatpush.msra.mxu0 %v571
      %604 = vmatpush.msra.mxu0 %v569
      %605 = vmatpush.msra.mxu0 %v567
      %606 = vmatpush.msra.mxu0 %v565
      %607 = vmatpush.msra.mxu0 %v563
      %608 = vmatmul.f32.gmra.mxu0 %v590
      %v609 = vpop.f32.mrf.mxu0
      %v610 = vadd.f32 %v586, %v609
      %611 = vdwg.mxu0
      %612 = vmatpush.msra.mxu0 0.0
      %613 = vmatpush.msra.mxu0 0.0
      %614 = vmatpush.msra.mxu0 0.0
      %615 = vmatpush.msra.mxu0 0.0
      %616 = vmatpush.msra.mxu0 0.0
      %617 = vmatpush.msra.mxu0 0.0
      %618 = vmatpush.msra.mxu0 0.0
      %619 = vmatpush.msra.mxu0 %v580
      %620 = vmatpush.msra.mxu0 %v578
      %621 = vmatpush.msra.mxu0 %v576
      %622 = vmatpush.msra.mxu0 %v574
      %623 = vmatpush.msra.mxu0 %v572
      %624 = vmatpush.msra.mxu0 %v570
      %625 = vmatpush.msra.mxu0 %v568
      %626 = vmatpush.msra.mxu0 %v566
      %627 = vmatpush.msra.mxu0 %v564
      %628 = vmatmul.f32.gmra.mxu0 %v590
      %v629 = vpop.f32.mrf.mxu0
      %v630 = vadd.f32 %v586, %v629
      %631 = vdwg.mxu0
      %vm632 = vcmp.ge.f32.partialorder %v610, 0.0
      %vm633 = vcmp.ge.f32.partialorder %v630, 0.0
      %v634 = vmul.f32 %v610, 0.2
      %v635 = vmul.f32 %v630, 0.2
      %v636 = vsel %vm632, %v610, %v634
      %v637 = vsel %vm633, %v630, %v635
      %638 = vrot.lane.b32.xlu0 %v636, 17
      %v639 = vpop.permute.xlu0 %638
      %640 = vrot.lane.b32.xlu0 %v637, 17
      %v641 = vpop.permute.xlu0 %640
      %v642 = vsel %vm437, %v639, %v641
      %v643 = vsel %vm437, %v641, %v639
      %v644 = vmul.f32 %v643, %v441
      %v645 = vmul.f32 %v642, %v442
      %646 = vrot.lane.b32.xlu0 %v636, 16
      %v647 = vpop.permute.xlu0 %646
      %648 = vrot.lane.b32.xlu0 %v637, 16
      %v649 = vpop.permute.xlu0 %648
      %v650 = vsel %vm451, %v647, %v649
      %v651 = vsel %vm451, %v649, %v647
      %v652 = vmul.f32 %v651, %v455
      %v653 = vmul.f32 %v650, %v456
      %654 = vrot.lane.b32.xlu0 %v636, 15
      %v655 = vpop.permute.xlu0 %654
      %656 = vrot.lane.b32.xlu0 %v637, 15
      %v657 = vpop.permute.xlu0 %656
      %v658 = vsel %vm465, %v655, %v657
      %v659 = vsel %vm465, %v657, %v655
      %v660 = vmul.f32 %v659, %v469
      %v661 = vmul.f32 %v658, %v470
      %662 = vrot.lane.b32.xlu0 %v636, 1
      %v663 = vpop.permute.xlu0 %662
      %664 = vrot.lane.b32.xlu0 %v637, 1
      %v665 = vpop.permute.xlu0 %664
      %v666 = vsel %vm479, %v663, %v665
      %v667 = vsel %vm479, %v665, %v663
      %v668 = vmul.f32 %v667, %v483
      %v669 = vmul.f32 %v666, %v484
      %670 = vrot.lane.b32.xlu0 %v636, 127
      %v671 = vpop.permute.xlu0 %670
      %672 = vrot.lane.b32.xlu0 %v637, 127
      %v673 = vpop.permute.xlu0 %672
      %v674 = vsel %vm493, %v671, %v673
      %v675 = vsel %vm493, %v673, %v671
      %v676 = vmul.f32 %v674, %v497
      %v677 = vmul.f32 %v675, %v498
      %678 = vrot.lane.b32.xlu0 %v636, 113
      %v679 = vpop.permute.xlu0 %678
      %680 = vrot.lane.b32.xlu0 %v637, 113
      %v681 = vpop.permute.xlu0 %680
      %v682 = vsel %vm507, %v679, %v681
      %v683 = vsel %vm507, %v681, %v679
      %v684 = vmul.f32 %v682, %v511
      %v685 = vmul.f32 %v683, %v512
      %686 = vrot.lane.b32.xlu0 %v636, 112
      %v687 = vpop.permute.xlu0 %686
      %688 = vrot.lane.b32.xlu0 %v637, 112
      %v689 = vpop.permute.xlu0 %688
      %v690 = vsel %vm521, %v687, %v689
      %v691 = vsel %vm521, %v689, %v687
      %v692 = vmul.f32 %v690, %v525
      %v693 = vmul.f32 %v691, %v526
      %694 = vrot.lane.b32.xlu0 %v636, 111
      %v695 = vpop.permute.xlu0 %694
      %696 = vrot.lane.b32.xlu0 %v637, 111
      %v697 = vpop.permute.xlu0 %696
      %v698 = vsel %vm535, %v695, %v697
      %v699 = vsel %vm535, %v697, %v695
      %v700 = vmul.f32 %v698, %v539
      %v701 = vmul.f32 %v699, %v540
      %702 = vst [vmem:[#allocation2 + $0x90] sm:$0xff] %v644
      %703 = vst [vmem:[#allocation2 + $0x98] sm:$0xff] %v645
      %704 = vst [vmem:[#allocation2 + $0xa0] sm:$0xff] %v652
      %705 = vst [vmem:[#allocation2 + $0xa8] sm:$0xff] %v653
      %706 = vst [vmem:[#allocation2 + $0xb0] sm:$0xff] %v660
      %707 = vst [vmem:[#allocation2 + $0xb8] sm:$0xff] %v661
      %708 = vst [vmem:[#allocation2 + $0xc0] sm:$0xff] %v668
      %709 = vst [vmem:[#allocation2 + $0xc8] sm:$0xff] %v669
      %710 = vst [vmem:[#allocation2 + $0xd0] sm:$0xff] %v636
      %711 = vst [vmem:[#allocation2 + $0xd8] sm:$0xff] %v637
      %712 = vst [vmem:[#allocation2 + $0xe0] sm:$0xff] %v676
      %713 = vst [vmem:[#allocation2 + $0xe8] sm:$0xff] %v677
      %714 = vst [vmem:[#allocation2 + $0xf0] sm:$0xff] %v684
      %715 = vst [vmem:[#allocation2 + $0xf8] sm:$0xff] %v685
      %716 = vst [vmem:[#allocation2 + $0x100] sm:$0xff] %v692
      %717 = vst [vmem:[#allocation2 + $0x108] sm:$0xff] %v693
      %718 = vst [vmem:[#allocation2 + $0x110] sm:$0xff] %v700
      %719 = vst [vmem:[#allocation2 + $0x118] sm:$0xff] %v701
      %v720 = vld [vmem:[#allocation2] sm:$0xff]
      %v721 = vld [vmem:[#allocation2 + $0x8] sm:$0xff]
      %v722 = vld [vmem:[#allocation2 + $0x10] sm:$0xff]
      %v723 = vld [vmem:[#allocation2 + $0x18] sm:$0xff]
      %v724 = vld [vmem:[#allocation2 + $0x20] sm:$0xff]
      %v725 = vld [vmem:[#allocation2 + $0x28] sm:$0xff]
      %v726 = vld [vmem:[#allocation2 + $0x30] sm:$0xff]
      %v727 = vld [vmem:[#allocation2 + $0x38] sm:$0xff]
      %v728 = vld [vmem:[#allocation2 + $0x40] sm:$0xff]
      %v729 = vld [vmem:[#allocation2 + $0x48] sm:$0xff]
      %v730 = vld [vmem:[#allocation2 + $0x50] sm:$0xff]
      %v731 = vld [vmem:[#allocation2 + $0x58] sm:$0xff]
      %v732 = vld [vmem:[#allocation2 + $0x60] sm:$0xff]
      %v733 = vld [vmem:[#allocation2 + $0x68] sm:$0xff]
      %v734 = vld [vmem:[#allocation2 + $0x70] sm:$0xff]
      %v735 = vld [vmem:[#allocation2 + $0x78] sm:$0xff]
      %v736 = vld [vmem:[#allocation2 + $0x80] sm:$0xff]
      %v737 = vld [vmem:[#allocation2 + $0x88] sm:$0xff]
      %v738 = vld [vmem:[#allocation2 + $0x90] sm:$0xff]
      %v739 = vld [vmem:[#allocation2 + $0x98] sm:$0xff]
      %v740 = vld [vmem:[#allocation2 + $0xa0] sm:$0xff]
      %v741 = vld [vmem:[#allocation2 + $0xa8] sm:$0xff]
      %v742 = vld [vmem:[#allocation2 + $0xb0] sm:$0xff]
      %v743 = vld [vmem:[#allocation2 + $0xb8] sm:$0xff]
      %v744 = vld [vmem:[#allocation2 + $0xc0] sm:$0xff]
      %v745 = vld [vmem:[#allocation2 + $0xc8] sm:$0xff]
      %v746 = vld [vmem:[#allocation2 + $0xd0] sm:$0xff]
      %v747 = vld [vmem:[#allocation2 + $0xd8] sm:$0xff]
      %v748 = vld [vmem:[#allocation2 + $0xe0] sm:$0xff]
      %v749 = vld [vmem:[#allocation2 + $0xe8] sm:$0xff]
      %v750 = vld [vmem:[#allocation2 + $0xf0] sm:$0xff]
      %v751 = vld [vmem:[#allocation2 + $0xf8] sm:$0xff]
      %v752 = vld [vmem:[#allocation2 + $0x100] sm:$0xff]
      %v753 = vld [vmem:[#allocation2 + $0x108] sm:$0xff]
      %v754 = vld [vmem:[#allocation2 + $0x110] sm:$0xff]
      %v755 = vld [vmem:[#allocation2 + $0x118] sm:$0xff]
      %v756 = vld [vmem:[%s3] sm:$0xff]
      %v757 = vld [vmem:[%s3 + $0x8] sm:$0xff]
      %v758 = vld [vmem:[%s8] sm:$0xff]
      %760 = vset.pattern.permute.xlu0 0
      %761 = vperm.xlu0 %760, %v758
      %v762 = vpop.permute.xlu0 %761
      %vm764 = vcmask 130048
      %v766 = vsel %vm764, %v757, 0
      %768 = vmatpush.msra.mxu0 %v750
      %769 = vmatpush.msra.mxu0 %v748
      %770 = vmatpush.msra.mxu0 %v746
      %771 = vmatpush.msra.mxu0 %v744
      %772 = vmatpush.msra.mxu0 %v742
      %773 = vmatpush.msra.mxu0 %v740
      %774 = vmatpush.msra.mxu0 %v738
      %775 = vmatpush.msra.mxu0 %v736
      %776 = vmatpush.msra.mxu0 %v734
      %777 = vmatpush.msra.mxu0 %v732
      %778 = vmatpush.msra.mxu0 %v730
      %779 = vmatpush.msra.mxu0 %v728
      %780 = vmatpush.msra.mxu0 %v726
      %781 = vmatpush.msra.mxu0 %v724
      %782 = vmatpush.msra.mxu0 %v722
      %783 = vmatpush.msra.mxu0 %v720
      %784 = vmatmul.f32.gmra.mxu0 %v756
      %v785 = vpop.f32.mrf.mxu0
      %v786 = vadd.f32 %v762, %v785
      %787 = vdwg.mxu0
      %788 = vmatpush.msra.mxu0 0.0
      %789 = vmatpush.msra.mxu0 0.0
      %790 = vmatpush.msra.mxu0 0.0
      %791 = vmatpush.msra.mxu0 0.0
      %792 = vmatpush.msra.mxu0 0.0
      %793 = vmatpush.msra.mxu0 0.0
      %794 = vmatpush.msra.mxu0 0.0
      %795 = vmatpush.msra.mxu0 0.0
      %796 = vmatpush.msra.mxu0 0.0
      %797 = vmatpush.msra.mxu0 0.0
      %798 = vmatpush.msra.mxu0 0.0
      %799 = vmatpush.msra.mxu0 0.0
      %800 = vmatpush.msra.mxu0 0.0
      %801 = vmatpush.msra.mxu0 0.0
      %802 = vmatpush.msra.mxu0 %v754
      %803 = vmatpush.msra.mxu0 %v752
      %804 = vmatmul.f32.gmra.mxu0 %v766
      %v805 = vpop.f32.mrf.mxu0
      %v806 = vadd.f32 %v786, %v805
      %807 = vdwg.mxu0
      %808 = vmatpush.msra.mxu0 %v751
      %809 = vmatpush.msra.mxu0 %v749
      %810 = vmatpush.msra.mxu0 %v747
      %811 = vmatpush.msra.mxu0 %v745
      %812 = vmatpush.msra.mxu0 %v743
      %813 = vmatpush.msra.mxu0 %v741
      %814 = vmatpush.msra.mxu0 %v739
      %815 = vmatpush.msra.mxu0 %v737
      %816 = vmatpush.msra.mxu0 %v735
      %817 = vmatpush.msra.mxu0 %v733
      %818 = vmatpush.msra.mxu0 %v731
      %819 = vmatpush.msra.mxu0 %v729
      %820 = vmatpush.msra.mxu0 %v727
      %821 = vmatpush.msra.mxu0 %v725
      %822 = vmatpush.msra.mxu0 %v723
      %823 = vmatpush.msra.mxu0 %v721
      %824 = vmatmul.f32.gmra.mxu0 %v756
      %v825 = vpop.f32.mrf.mxu0
      %v826 = vadd.f32 %v762, %v825
      %827 = vdwg.mxu0
      %828 = vmatpush.msra.mxu0 0.0
      %829 = vmatpush.msra.mxu0 0.0
      %830 = vmatpush.msra.mxu0 0.0
      %831 = vmatpush.msra.mxu0 0.0
      %832 = vmatpush.msra.mxu0 0.0
      %833 = vmatpush.msra.mxu0 0.0
      %834 = vmatpush.msra.mxu0 0.0
      %835 = vmatpush.msra.mxu0 0.0
      %836 = vmatpush.msra.mxu0 0.0
      %837 = vmatpush.msra.mxu0 0.0
      %838 = vmatpush.msra.mxu0 0.0
      %839 = vmatpush.msra.mxu0 0.0
      %840 = vmatpush.msra.mxu0 0.0
      %841 = vmatpush.msra.mxu0 0.0
      %842 = vmatpush.msra.mxu0 %v755
      %843 = vmatpush.msra.mxu0 %v753
      %844 = vmatmul.f32.gmra.mxu0 %v766
      %v845 = vpop.f32.mrf.mxu0
      %v846 = vadd.f32 %v826, %v845
      %847 = vdwg.mxu0
      %vm848 = vcmp.ge.f32.partialorder %v806, 0.0
      %vm849 = vcmp.ge.f32.partialorder %v846, 0.0
      %v850 = vmul.f32 %v806, 0.2
      %v851 = vmul.f32 %v846, 0.2
      %v852 = vsel %vm848, %v806, %v850
      %v853 = vsel %vm849, %v846, %v851
      %854 = vrot.lane.b32.xlu0 %v852, 17
      %v855 = vpop.permute.xlu0 %854
      %856 = vrot.lane.b32.xlu0 %v853, 17
      %v857 = vpop.permute.xlu0 %856
      %v858 = vsel %vm437, %v855, %v857
      %v859 = vsel %vm437, %v857, %v855
      %v860 = vmul.f32 %v859, %v441
      %v861 = vmul.f32 %v858, %v442
      %862 = vrot.lane.b32.xlu0 %v852, 16
      %v863 = vpop.permute.xlu0 %862
      %864 = vrot.lane.b32.xlu0 %v853, 16
      %v865 = vpop.permute.xlu0 %864
      %v866 = vsel %vm451, %v863, %v865
      %v867 = vsel %vm451, %v865, %v863
      %v868 = vmul.f32 %v867, %v455
      %v869 = vmul.f32 %v866, %v456
      %870 = vrot.lane.b32.xlu0 %v852, 15
      %v871 = vpop.permute.xlu0 %870
      %872 = vrot.lane.b32.xlu0 %v853, 15
      %v873 = vpop.permute.xlu0 %872
      %v874 = vsel %vm465, %v871, %v873
      %v875 = vsel %vm465, %v873, %v871
      %v876 = vmul.f32 %v875, %v469
      %v877 = vmul.f32 %v874, %v470
      %878 = vrot.lane.b32.xlu0 %v852, 1
      %v879 = vpop.permute.xlu0 %878
      %880 = vrot.lane.b32.xlu0 %v853, 1
      %v881 = vpop.permute.xlu0 %880
      %v882 = vsel %vm479, %v879, %v881
      %v883 = vsel %vm479, %v881, %v879
      %v884 = vmul.f32 %v883, %v483
      %v885 = vmul.f32 %v882, %v484
      %886 = vrot.lane.b32.xlu0 %v852, 127
      %v887 = vpop.permute.xlu0 %886
      %888 = vrot.lane.b32.xlu0 %v853, 127
      %v889 = vpop.permute.xlu0 %888
      %v890 = vsel %vm493, %v887, %v889
      %v891 = vsel %vm493, %v889, %v887
      %v892 = vmul.f32 %v890, %v497
      %v893 = vmul.f32 %v891, %v498
      %894 = vrot.lane.b32.xlu0 %v852, 113
      %v895 = vpop.permute.xlu0 %894
      %896 = vrot.lane.b32.xlu0 %v853, 113
      %v897 = vpop.permute.xlu0 %896
      %v898 = vsel %vm507, %v895, %v897
      %v899 = vsel %vm507, %v897, %v895
      %v900 = vmul.f32 %v898, %v511
      %v901 = vmul.f32 %v899, %v512
      %902 = vrot.lane.b32.xlu0 %v852, 112
      %v903 = vpop.permute.xlu0 %902
      %904 = vrot.lane.b32.xlu0 %v853, 112
      %v905 = vpop.permute.xlu0 %904
      %v906 = vsel %vm521, %v903, %v905
      %v907 = vsel %vm521, %v905, %v903
      %v908 = vmul.f32 %v906, %v525
      %v909 = vmul.f32 %v907, %v526
      %910 = vrot.lane.b32.xlu0 %v852, 111
      %v911 = vpop.permute.xlu0 %910
      %912 = vrot.lane.b32.xlu0 %v853, 111
      %v913 = vpop.permute.xlu0 %912
      %v914 = vsel %vm535, %v911, %v913
      %v915 = vsel %vm535, %v913, %v911
      %v916 = vmul.f32 %v914, %v539
      %v917 = vmul.f32 %v915, %v540
      %918 = vst [vmem:[#allocation2 + $0x120] sm:$0xff] %v860
      %919 = vst [vmem:[#allocation2 + $0x128] sm:$0xff] %v861
      %920 = vst [vmem:[#allocation2 + $0x130] sm:$0xff] %v868
      %921 = vst [vmem:[#allocation2 + $0x138] sm:$0xff] %v869
      %922 = vst [vmem:[#allocation2 + $0x140] sm:$0xff] %v876
      %923 = vst [vmem:[#allocation2 + $0x148] sm:$0xff] %v877
      %924 = vst [vmem:[#allocation2 + $0x150] sm:$0xff] %v884
      %925 = vst [vmem:[#allocation2 + $0x158] sm:$0xff] %v885
      %926 = vst [vmem:[#allocation2 + $0x160] sm:$0xff] %v852
      %927 = vst [vmem:[#allocation2 + $0x168] sm:$0xff] %v853
      %928 = vst [vmem:[#allocation2 + $0x170] sm:$0xff] %v892
      %929 = vst [vmem:[#allocation2 + $0x178] sm:$0xff] %v893
      %930 = vst [vmem:[#allocation2 + $0x180] sm:$0xff] %v900
      %931 = vst [vmem:[#allocation2 + $0x188] sm:$0xff] %v901
      %932 = vst [vmem:[#allocation2 + $0x190] sm:$0xff] %v908
      %933 = vst [vmem:[#allocation2 + $0x198] sm:$0xff] %v909
      %934 = vst [vmem:[#allocation2 + $0x1a0] sm:$0xff] %v916
      %935 = vst [vmem:[#allocation2 + $0x1a8] sm:$0xff] %v917
      %v936 = vld [vmem:[#allocation2] sm:$0xff]
      %v937 = vld [vmem:[#allocation2 + $0x8] sm:$0xff]
      %v938 = vld [vmem:[#allocation2 + $0x10] sm:$0xff]
      %v939 = vld [vmem:[#allocation2 + $0x18] sm:$0xff]
      %v940 = vld [vmem:[#allocation2 + $0x20] sm:$0xff]
      %v941 = vld [vmem:[#allocation2 + $0x28] sm:$0xff]
      %v942 = vld [vmem:[#allocation2 + $0x30] sm:$0xff]
      %v943 = vld [vmem:[#allocation2 + $0x38] sm:$0xff]
      %v944 = vld [vmem:[#allocation2 + $0x40] sm:$0xff]
      %v945 = vld [vmem:[#allocation2 + $0x48] sm:$0xff]
      %v946 = vld [vmem:[#allocation2 + $0x50] sm:$0xff]
      %v947 = vld [vmem:[#allocation2 + $0x58] sm:$0xff]
      %v948 = vld [vmem:[#allocation2 + $0x60] sm:$0xff]
      %v949 = vld [vmem:[#allocation2 + $0x68] sm:$0xff]
      %v950 = vld [vmem:[#allocation2 + $0x70] sm:$0xff]
      %v951 = vld [vmem:[#allocation2 + $0x78] sm:$0xff]
      %v952 = vld [vmem:[#allocation2 + $0x80] sm:$0xff]
      %v953 = vld [vmem:[#allocation2 + $0x88] sm:$0xff]
      %v954 = vld [vmem:[#allocation2 + $0x90] sm:$0xff]
      %v955 = vld [vmem:[#allocation2 + $0x98] sm:$0xff]
      %v956 = vld [vmem:[#allocation2 + $0xa0] sm:$0xff]
      %v957 = vld [vmem:[#allocation2 + $0xa8] sm:$0xff]
      %v958 = vld [vmem:[#allocation2 + $0xb0] sm:$0xff]
      %v959 = vld [vmem:[#allocation2 + $0xb8] sm:$0xff]
      %v960 = vld [vmem:[#allocation2 + $0xc0] sm:$0xff]
      %v961 = vld [vmem:[#allocation2 + $0xc8] sm:$0xff]
      %v962 = vld [vmem:[#allocation2 + $0xd0] sm:$0xff]
      %v963 = vld [vmem:[#allocation2 + $0xd8] sm:$0xff]
      %v964 = vld [vmem:[#allocation2 + $0xe0] sm:$0xff]
      %v965 = vld [vmem:[#allocation2 + $0xe8] sm:$0xff]
      %v966 = vld [vmem:[#allocation2 + $0xf0] sm:$0xff]
      %v967 = vld [vmem:[#allocation2 + $0xf8] sm:$0xff]
      %v968 = vld [vmem:[#allocation2 + $0x100] sm:$0xff]
      %v969 = vld [vmem:[#allocation2 + $0x108] sm:$0xff]
      %v970 = vld [vmem:[#allocation2 + $0x110] sm:$0xff]
      %v971 = vld [vmem:[#allocation2 + $0x118] sm:$0xff]
      %v972 = vld [vmem:[#allocation2 + $0x120] sm:$0xff]
      %v973 = vld [vmem:[#allocation2 + $0x128] sm:$0xff]
      %v974 = vld [vmem:[#allocation2 + $0x130] sm:$0xff]
      %v975 = vld [vmem:[#allocation2 + $0x138] sm:$0xff]
      %v976 = vld [vmem:[#allocation2 + $0x140] sm:$0xff]
      %v977 = vld [vmem:[#allocation2 + $0x148] sm:$0xff]
      %v978 = vld [vmem:[#allocation2 + $0x150] sm:$0xff]
      %v979 = vld [vmem:[#allocation2 + $0x158] sm:$0xff]
      %v980 = vld [vmem:[#allocation2 + $0x160] sm:$0xff]
      %v981 = vld [vmem:[#allocation2 + $0x168] sm:$0xff]
      %v982 = vld [vmem:[#allocation2 + $0x170] sm:$0xff]
      %v983 = vld [vmem:[#allocation2 + $0x178] sm:$0xff]
      %v984 = vld [vmem:[#allocation2 + $0x180] sm:$0xff]
      %v985 = vld [vmem:[#allocation2 + $0x188] sm:$0xff]
      %v986 = vld [vmem:[#allocation2 + $0x190] sm:$0xff]
      %v987 = vld [vmem:[#allocation2 + $0x198] sm:$0xff]
      %v988 = vld [vmem:[#allocation2 + $0x1a0] sm:$0xff]
      %v989 = vld [vmem:[#allocation2 + $0x1a8] sm:$0xff]
      %v990 = vld [vmem:[%s4] sm:$0xff]
      %v991 = vld [vmem:[%s4 + $0x8] sm:$0xff]
      %v992 = vld [vmem:[%s9] sm:$0xff]
      %994 = vset.pattern.permute.xlu0 0
      %995 = vperm.xlu0 %994, %v992
      %v996 = vpop.permute.xlu0 %995
      %vm998 = vcmask 719872
      %v1000 = vsel %vm998, %v991, 0
      %1002 = vmatpush.msra.mxu0 %v966
      %1003 = vmatpush.msra.mxu0 %v964
      %1004 = vmatpush.msra.mxu0 %v962
      %1005 = vmatpush.msra.mxu0 %v960
      %1006 = vmatpush.msra.mxu0 %v958
      %1007 = vmatpush.msra.mxu0 %v956
      %1008 = vmatpush.msra.mxu0 %v954
      %1009 = vmatpush.msra.mxu0 %v952
      %1010 = vmatpush.msra.mxu0 %v950
      %1011 = vmatpush.msra.mxu0 %v948
      %1012 = vmatpush.msra.mxu0 %v946
      %1013 = vmatpush.msra.mxu0 %v944
      %1014 = vmatpush.msra.mxu0 %v942
      %1015 = vmatpush.msra.mxu0 %v940
      %1016 = vmatpush.msra.mxu0 %v938
      %1017 = vmatpush.msra.mxu0 %v936
      %1018 = vmatmul.f32.gmra.mxu0 %v990
      %v1019 = vpop.f32.mrf.mxu0
      %v1020 = vadd.f32 %v996, %v1019
      %1021 = vdwg.mxu0
      %1022 = vmatpush.msra.mxu0 0.0
      %1023 = vmatpush.msra.mxu0 0.0
      %1024 = vmatpush.msra.mxu0 0.0
      %1025 = vmatpush.msra.mxu0 0.0
      %1026 = vmatpush.msra.mxu0 0.0
      %1027 = vmatpush.msra.mxu0 %v988
      %1028 = vmatpush.msra.mxu0 %v986
      %1029 = vmatpush.msra.mxu0 %v984
      %1030 = vmatpush.msra.mxu0 %v982
      %1031 = vmatpush.msra.mxu0 %v980
      %1032 = vmatpush.msra.mxu0 %v978
      %1033 = vmatpush.msra.mxu0 %v976
      %1034 = vmatpush.msra.mxu0 %v974
      %1035 = vmatpush.msra.mxu0 %v972
      %1036 = vmatpush.msra.mxu0 %v970
      %1037 = vmatpush.msra.mxu0 %v968
      %1038 = vmatmul.f32.gmra.mxu0 %v1000
      %v1039 = vpop.f32.mrf.mxu0
      %v1040 = vadd.f32 %v1020, %v1039
      %1041 = vdwg.mxu0
      %1042 = vmatpush.msra.mxu0 %v967
      %1043 = vmatpush.msra.mxu0 %v965
      %1044 = vmatpush.msra.mxu0 %v963
      %1045 = vmatpush.msra.mxu0 %v961
      %1046 = vmatpush.msra.mxu0 %v959
      %1047 = vmatpush.msra.mxu0 %v957
      %1048 = vmatpush.msra.mxu0 %v955
      %1049 = vmatpush.msra.mxu0 %v953
      %1050 = vmatpush.msra.mxu0 %v951
      %1051 = vmatpush.msra.mxu0 %v949
      %1052 = vmatpush.msra.mxu0 %v947
      %1053 = vmatpush.msra.mxu0 %v945
      %1054 = vmatpush.msra.mxu0 %v943
      %1055 = vmatpush.msra.mxu0 %v941
      %1056 = vmatpush.msra.mxu0 %v939
      %1057 = vmatpush.msra.mxu0 %v937
      %1058 = vmatmul.f32.gmra.mxu0 %v990
      %v1059 = vpop.f32.mrf.mxu0
      %v1060 = vadd.f32 %v996, %v1059
      %1061 = vdwg.mxu0
      %1062 = vmatpush.msra.mxu0 0.0
      %1063 = vmatpush.msra.mxu0 0.0
      %1064 = vmatpush.msra.mxu0 0.0
      %1065 = vmatpush.msra.mxu0 0.0
      %1066 = vmatpush.msra.mxu0 0.0
      %1067 = vmatpush.msra.mxu0 %v989
      %1068 = vmatpush.msra.mxu0 %v987
      %1069 = vmatpush.msra.mxu0 %v985
      %1070 = vmatpush.msra.mxu0 %v983
      %1071 = vmatpush.msra.mxu0 %v981
      %1072 = vmatpush.msra.mxu0 %v979
      %1073 = vmatpush.msra.mxu0 %v977
      %1074 = vmatpush.msra.mxu0 %v975
      %1075 = vmatpush.msra.mxu0 %v973
      %1076 = vmatpush.msra.mxu0 %v971
      %1077 = vmatpush.msra.mxu0 %v969
      %1078 = vmatmul.f32.gmra.mxu0 %v1000
      %v1079 = vpop.f32.mrf.mxu0
      %v1080 = vadd.f32 %v1060, %v1079
      %1081 = vdwg.mxu0
      %vm1082 = vcmp.ge.f32.partialorder %v1040, 0.0
      %vm1083 = vcmp.ge.f32.partialorder %v1080, 0.0
      %v1084 = vmul.f32 %v1040, 0.2
      %v1085 = vmul.f32 %v1080, 0.2
      %v1086 = vsel %vm1082, %v1040, %v1084
      %v1087 = vsel %vm1083, %v1080, %v1085
      %1088 = vrot.lane.b32.xlu0 %v1086, 17
      %v1089 = vpop.permute.xlu0 %1088
      %1090 = vrot.lane.b32.xlu0 %v1087, 17
      %v1091 = vpop.permute.xlu0 %1090
      %v1092 = vsel %vm437, %v1089, %v1091
      %v1093 = vsel %vm437, %v1091, %v1089
      %v1094 = vmul.f32 %v1093, %v441
      %v1095 = vmul.f32 %v1092, %v442
      %1096 = vrot.lane.b32.xlu0 %v1086, 16
      %v1097 = vpop.permute.xlu0 %1096
      %1098 = vrot.lane.b32.xlu0 %v1087, 16
      %v1099 = vpop.permute.xlu0 %1098
      %v1100 = vsel %vm451, %v1097, %v1099
      %v1101 = vsel %vm451, %v1099, %v1097
      %v1102 = vmul.f32 %v1101, %v455
      %v1103 = vmul.f32 %v1100, %v456
      %1104 = vrot.lane.b32.xlu0 %v1086, 15
      %v1105 = vpop.permute.xlu0 %1104
      %1106 = vrot.lane.b32.xlu0 %v1087, 15
      %v1107 = vpop.permute.xlu0 %1106
      %v1108 = vsel %vm465, %v1105, %v1107
      %v1109 = vsel %vm465, %v1107, %v1105
      %v1110 = vmul.f32 %v1109, %v469
      %v1111 = vmul.f32 %v1108, %v470
      %1112 = vrot.lane.b32.xlu0 %v1086, 1
      %v1113 = vpop.permute.xlu0 %1112
      %1114 = vrot.lane.b32.xlu0 %v1087, 1
      %v1115 = vpop.permute.xlu0 %1114
      %v1116 = vsel %vm479, %v1113, %v1115
      %v1117 = vsel %vm479, %v1115, %v1113
      %v1118 = vmul.f32 %v1117, %v483
      %v1119 = vmul.f32 %v1116, %v484
      %1120 = vrot.lane.b32.xlu0 %v1086, 127
      %v1121 = vpop.permute.xlu0 %1120
      %1122 = vrot.lane.b32.xlu0 %v1087, 127
      %v1123 = vpop.permute.xlu0 %1122
      %v1124 = vsel %vm493, %v1121, %v1123
      %v1125 = vsel %vm493, %v1123, %v1121
      %v1126 = vmul.f32 %v1124, %v497
      %v1127 = vmul.f32 %v1125, %v498
      %1128 = vrot.lane.b32.xlu0 %v1086, 113
      %v1129 = vpop.permute.xlu0 %1128
      %1130 = vrot.lane.b32.xlu0 %v1087, 113
      %v1131 = vpop.permute.xlu0 %1130
      %v1132 = vsel %vm507, %v1129, %v1131
      %v1133 = vsel %vm507, %v1131, %v1129
      %v1134 = vmul.f32 %v1132, %v511
      %v1135 = vmul.f32 %v1133, %v512
      %1136 = vrot.lane.b32.xlu0 %v1086, 112
      %v1137 = vpop.permute.xlu0 %1136
      %1138 = vrot.lane.b32.xlu0 %v1087, 112
      %v1139 = vpop.permute.xlu0 %1138
      %v1140 = vsel %vm521, %v1137, %v1139
      %v1141 = vsel %vm521, %v1139, %v1137
      %v1142 = vmul.f32 %v1140, %v525
      %v1143 = vmul.f32 %v1141, %v526
      %1144 = vrot.lane.b32.xlu0 %v1086, 111
      %v1145 = vpop.permute.xlu0 %1144
      %1146 = vrot.lane.b32.xlu0 %v1087, 111
      %v1147 = vpop.permute.xlu0 %1146
      %v1148 = vsel %vm535, %v1145, %v1147
      %v1149 = vsel %vm535, %v1147, %v1145
      %v1150 = vmul.f32 %v1148, %v539
      %v1151 = vmul.f32 %v1149, %v540
      %1152 = vst [vmem:[#allocation2 + $0x1b0] sm:$0xff] %v1094
      %1153 = vst [vmem:[#allocation2 + $0x1b8] sm:$0xff] %v1095
      %1154 = vst [vmem:[#allocation2 + $0x1c0] sm:$0xff] %v1102
      %1155 = vst [vmem:[#allocation2 + $0x1c8] sm:$0xff] %v1103
      %1156 = vst [vmem:[#allocation2 + $0x1d0] sm:$0xff] %v1110
      %1157 = vst [vmem:[#allocation2 + $0x1d8] sm:$0xff] %v1111
      %1158 = vst [vmem:[#allocation2 + $0x1e0] sm:$0xff] %v1118
      %1159 = vst [vmem:[#allocation2 + $0x1e8] sm:$0xff] %v1119
      %1160 = vst [vmem:[#allocation2 + $0x1f0] sm:$0xff] %v1086
      %1161 = vst [vmem:[#allocation2 + $0x1f8] sm:$0xff] %v1087
      %1162 = vst [vmem:[#allocation2 + $0x200] sm:$0xff] %v1126
      %1163 = vst [vmem:[#allocation2 + $0x208] sm:$0xff] %v1127
      %1164 = vst [vmem:[#allocation2 + $0x210] sm:$0xff] %v1134
      %1165 = vst [vmem:[#allocation2 + $0x218] sm:$0xff] %v1135
      %1166 = vst [vmem:[#allocation2 + $0x220] sm:$0xff] %v1142
      %1167 = vst [vmem:[#allocation2 + $0x228] sm:$0xff] %v1143
      %1168 = vst [vmem:[#allocation2 + $0x230] sm:$0xff] %v1150
      %1169 = vst [vmem:[#allocation2 + $0x238] sm:$0xff] %v1151
      %v1170 = vld [vmem:[#allocation2] sm:$0xff]
      %v1171 = vld [vmem:[#allocation2 + $0x8] sm:$0xff]
      %v1172 = vld [vmem:[#allocation2 + $0x10] sm:$0xff]
      %v1173 = vld [vmem:[#allocation2 + $0x18] sm:$0xff]
      %v1174 = vld [vmem:[#allocation2 + $0x20] sm:$0xff]
      %v1175 = vld [vmem:[#allocation2 + $0x28] sm:$0xff]
      %v1176 = vld [vmem:[#allocation2 + $0x30] sm:$0xff]
      %v1177 = vld [vmem:[#allocation2 + $0x38] sm:$0xff]
      %v1178 = vld [vmem:[#allocation2 + $0x40] sm:$0xff]
      %v1179 = vld [vmem:[#allocation2 + $0x48] sm:$0xff]
      %v1180 = vld [vmem:[#allocation2 + $0x50] sm:$0xff]
      %v1181 = vld [vmem:[#allocation2 + $0x58] sm:$0xff]
      %v1182 = vld [vmem:[#allocation2 + $0x60] sm:$0xff]
      %v1183 = vld [vmem:[#allocation2 + $0x68] sm:$0xff]
      %v1184 = vld [vmem:[#allocation2 + $0x70] sm:$0xff]
      %v1185 = vld [vmem:[#allocation2 + $0x78] sm:$0xff]
      %v1186 = vld [vmem:[#allocation2 + $0x80] sm:$0xff]
      %v1187 = vld [vmem:[#allocation2 + $0x88] sm:$0xff]
      %v1188 = vld [vmem:[#allocation2 + $0x90] sm:$0xff]
      %v1189 = vld [vmem:[#allocation2 + $0x98] sm:$0xff]
      %v1190 = vld [vmem:[#allocation2 + $0xa0] sm:$0xff]
      %v1191 = vld [vmem:[#allocation2 + $0xa8] sm:$0xff]
      %v1192 = vld [vmem:[#allocation2 + $0xb0] sm:$0xff]
      %v1193 = vld [vmem:[#allocation2 + $0xb8] sm:$0xff]
      %v1194 = vld [vmem:[#allocation2 + $0xc0] sm:$0xff]
      %v1195 = vld [vmem:[#allocation2 + $0xc8] sm:$0xff]
      %v1196 = vld [vmem:[#allocation2 + $0xd0] sm:$0xff]
      %v1197 = vld [vmem:[#allocation2 + $0xd8] sm:$0xff]
      %v1198 = vld [vmem:[#allocation2 + $0xe0] sm:$0xff]
      %v1199 = vld [vmem:[#allocation2 + $0xe8] sm:$0xff]
      %v1200 = vld [vmem:[#allocation2 + $0xf0] sm:$0xff]
      %v1201 = vld [vmem:[#allocation2 + $0xf8] sm:$0xff]
      %v1202 = vld [vmem:[#allocation2 + $0x100] sm:$0xff]
      %v1203 = vld [vmem:[#allocation2 + $0x108] sm:$0xff]
      %v1204 = vld [vmem:[#allocation2 + $0x110] sm:$0xff]
      %v1205 = vld [vmem:[#allocation2 + $0x118] sm:$0xff]
      %v1206 = vld [vmem:[#allocation2 + $0x120] sm:$0xff]
      %v1207 = vld [vmem:[#allocation2 + $0x128] sm:$0xff]
      %v1208 = vld [vmem:[#allocation2 + $0x130] sm:$0xff]
      %v1209 = vld [vmem:[#allocation2 + $0x138] sm:$0xff]
      %v1210 = vld [vmem:[#allocation2 + $0x140] sm:$0xff]
      %v1211 = vld [vmem:[#allocation2 + $0x148] sm:$0xff]
      %v1212 = vld [vmem:[#allocation2 + $0x150] sm:$0xff]
      %v1213 = vld [vmem:[#allocation2 + $0x158] sm:$0xff]
      %v1214 = vld [vmem:[#allocation2 + $0x160] sm:$0xff]
      %v1215 = vld [vmem:[#allocation2 + $0x168] sm:$0xff]
      %v1216 = vld [vmem:[#allocation2 + $0x170] sm:$0xff]
      %v1217 = vld [vmem:[#allocation2 + $0x178] sm:$0xff]
      %v1218 = vld [vmem:[#allocation2 + $0x180] sm:$0xff]
      %v1219 = vld [vmem:[#allocation2 + $0x188] sm:$0xff]
      %v1220 = vld [vmem:[#allocation2 + $0x190] sm:$0xff]
      %v1221 = vld [vmem:[#allocation2 + $0x198] sm:$0xff]
      %v1222 = vld [vmem:[#allocation2 + $0x1a0] sm:$0xff]
      %v1223 = vld [vmem:[#allocation2 + $0x1a8] sm:$0xff]
      %v1224 = vld [vmem:[#allocation2 + $0x1b0] sm:$0xff]
      %v1225 = vld [vmem:[#allocation2 + $0x1b8] sm:$0xff]
      %v1226 = vld [vmem:[#allocation2 + $0x1c0] sm:$0xff]
      %v1227 = vld [vmem:[#allocation2 + $0x1c8] sm:$0xff]
      %v1228 = vld [vmem:[#allocation2 + $0x1d0] sm:$0xff]
      %v1229 = vld [vmem:[#allocation2 + $0x1d8] sm:$0xff]
      %v1230 = vld [vmem:[#allocation2 + $0x1e0] sm:$0xff]
      %v1231 = vld [vmem:[#allocation2 + $0x1e8] sm:$0xff]
      %v1232 = vld [vmem:[#allocation2 + $0x1f0] sm:$0xff]
      %v1233 = vld [vmem:[#allocation2 + $0x1f8] sm:$0xff]
      %v1234 = vld [vmem:[#allocation2 + $0x200] sm:$0xff]
      %v1235 = vld [vmem:[#allocation2 + $0x208] sm:$0xff]
      %v1236 = vld [vmem:[#allocation2 + $0x210] sm:$0xff]
      %v1237 = vld [vmem:[#allocation2 + $0x218] sm:$0xff]
      %v1238 = vld [vmem:[#allocation2 + $0x220] sm:$0xff]
      %v1239 = vld [vmem:[#allocation2 + $0x228] sm:$0xff]
      %v1240 = vld [vmem:[#allocation2 + $0x230] sm:$0xff]
      %v1241 = vld [vmem:[#allocation2 + $0x238] sm:$0xff]
      %v1242 = vld [vmem:[%s5] sm:$0xff]
      %v1243 = vld [vmem:[%s5 + $0x8] sm:$0xff]
      %v1244 = vld [vmem:[%s5 + $0x10] sm:$0xff]
      %v1245 = vld [vmem:[%s10] sm:$0xff]
      %1247 = vset.pattern.permute.xlu0 0
      %1248 = vperm.xlu0 %1247, %v1245
      %v1249 = vpop.permute.xlu0 %1248
      %vm1251 = vcmask 261120
      %v1253 = vsel %vm1251, %v1244, 0
      %1255 = vmatpush.msra.mxu0 %v1200
      %1256 = vmatpush.msra.mxu0 %v1198
      %1257 = vmatpush.msra.mxu0 %v1196
      %1258 = vmatpush.msra.mxu0 %v1194
      %1259 = vmatpush.msra.mxu0 %v1192
      %1260 = vmatpush.msra.mxu0 %v1190
      %1261 = vmatpush.msra.mxu0 %v1188
      %1262 = vmatpush.msra.mxu0 %v1186
      %1263 = vmatpush.msra.mxu0 %v1184
      %1264 = vmatpush.msra.mxu0 %v1182
      %1265 = vmatpush.msra.mxu0 %v1180
      %1266 = vmatpush.msra.mxu0 %v1178
      %1267 = vmatpush.msra.mxu0 %v1176
      %1268 = vmatpush.msra.mxu0 %v1174
      %1269 = vmatpush.msra.mxu0 %v1172
      %1270 = vmatpush.msra.mxu0 %v1170
      %1271 = vmatmul.f32.gmra.mxu0 %v1242
      %v1272 = vpop.f32.mrf.mxu0
      %v1273 = vadd.f32 %v1249, %v1272
      %1274 = vdwg.mxu0
      %1275 = vmatpush.msra.mxu0 %v1232
      %1276 = vmatpush.msra.mxu0 %v1230
      %1277 = vmatpush.msra.mxu0 %v1228
      %1278 = vmatpush.msra.mxu0 %v1226
      %1279 = vmatpush.msra.mxu0 %v1224
      %1280 = vmatpush.msra.mxu0 %v1222
      %1281 = vmatpush.msra.mxu0 %v1220
      %1282 = vmatpush.msra.mxu0 %v1218
      %1283 = vmatpush.msra.mxu0 %v1216
      %1284 = vmatpush.msra.mxu0 %v1214
      %1285 = vmatpush.msra.mxu0 %v1212
      %1286 = vmatpush.msra.mxu0 %v1210
      %1287 = vmatpush.msra.mxu0 %v1208
      %1288 = vmatpush.msra.mxu0 %v1206
      %1289 = vmatpush.msra.mxu0 %v1204
      %1290 = vmatpush.msra.mxu0 %v1202
      %1291 = vmatmul.f32.gmra.mxu0 %v1243
      %v1292 = vpop.f32.mrf.mxu0
      %v1293 = vadd.f32 %v1273, %v1292
      %1294 = vdwg.mxu0
      %1295 = vmatpush.msra.mxu0 0.0
      %1296 = vmatpush.msra.mxu0 0.0
      %1297 = vmatpush.msra.mxu0 0.0
      %1298 = vmatpush.msra.mxu0 0.0
      %1299 = vmatpush.msra.mxu0 0.0
      %1300 = vmatpush.msra.mxu0 0.0
      %1301 = vmatpush.msra.mxu0 0.0
      %1302 = vmatpush.msra.mxu0 0.0
      %1303 = vmatpush.msra.mxu0 0.0
      %1304 = vmatpush.msra.mxu0 0.0
      %1305 = vmatpush.msra.mxu0 0.0
      %1306 = vmatpush.msra.mxu0 0.0
      %1307 = vmatpush.msra.mxu0 %v1240
      %1308 = vmatpush.msra.mxu0 %v1238
      %1309 = vmatpush.msra.mxu0 %v1236
      %1310 = vmatpush.msra.mxu0 %v1234
      %1311 = vmatmul.f32.gmra.mxu0 %v1253
      %v1312 = vpop.f32.mrf.mxu0
      %v1313 = vadd.f32 %v1293, %v1312
      %1314 = vdwg.mxu0
      %1315 = vmatpush.msra.mxu0 %v1201
      %1316 = vmatpush.msra.mxu0 %v1199
      %1317 = vmatpush.msra.mxu0 %v1197
      %1318 = vmatpush.msra.mxu0 %v1195
      %1319 = vmatpush.msra.mxu0 %v1193
      %1320 = vmatpush.msra.mxu0 %v1191
      %1321 = vmatpush.msra.mxu0 %v1189
      %1322 = vmatpush.msra.mxu0 %v1187
      %1323 = vmatpush.msra.mxu0 %v1185
      %1324 = vmatpush.msra.mxu0 %v1183
      %1325 = vmatpush.msra.mxu0 %v1181
      %1326 = vmatpush.msra.mxu0 %v1179
      %1327 = vmatpush.msra.mxu0 %v1177
      %1328 = vmatpush.msra.mxu0 %v1175
      %1329 = vmatpush.msra.mxu0 %v1173
      %1330 = vmatpush.msra.mxu0 %v1171
      %1331 = vmatmul.f32.gmra.mxu0 %v1242
      %v1332 = vpop.f32.mrf.mxu0
      %v1333 = vadd.f32 %v1249, %v1332
      %1334 = vdwg.mxu0
      %1335 = vmatpush.msra.mxu0 %v1233
      %1336 = vmatpush.msra.mxu0 %v1231
      %1337 = vmatpush.msra.mxu0 %v1229
      %1338 = vmatpush.msra.mxu0 %v1227
      %1339 = vmatpush.msra.mxu0 %v1225
      %1340 = vmatpush.msra.mxu0 %v1223
      %1341 = vmatpush.msra.mxu0 %v1221
      %1342 = vmatpush.msra.mxu0 %v1219
      %1343 = vmatpush.msra.mxu0 %v1217
      %1344 = vmatpush.msra.mxu0 %v1215
      %1345 = vmatpush.msra.mxu0 %v1213
      %1346 = vmatpush.msra.mxu0 %v1211
      %1347 = vmatpush.msra.mxu0 %v1209
      %1348 = vmatpush.msra.mxu0 %v1207
      %1349 = vmatpush.msra.mxu0 %v1205
      %1350 = vmatpush.msra.mxu0 %v1203
      %1351 = vmatmul.f32.gmra.mxu0 %v1243
      %v1352 = vpop.f32.mrf.mxu0
      %v1353 = vadd.f32 %v1333, %v1352
      %1354 = vdwg.mxu0
      %1355 = vmatpush.msra.mxu0 0.0
      %1356 = vmatpush.msra.mxu0 0.0
      %1357 = vmatpush.msra.mxu0 0.0
      %1358 = vmatpush.msra.mxu0 0.0
      %1359 = vmatpush.msra.mxu0 0.0
      %1360 = vmatpush.msra.mxu0 0.0
      %1361 = vmatpush.msra.mxu0 0.0
      %1362 = vmatpush.msra.mxu0 0.0
      %1363 = vmatpush.msra.mxu0 0.0
      %1364 = vmatpush.msra.mxu0 0.0
      %1365 = vmatpush.msra.mxu0 0.0
      %1366 = vmatpush.msra.mxu0 0.0
      %1367 = vmatpush.msra.mxu0 %v1241
      %1368 = vmatpush.msra.mxu0 %v1239
      %1369 = vmatpush.msra.mxu0 %v1237
      %1370 = vmatpush.msra.mxu0 %v1235
      %1371 = vmatmul.f32.gmra.mxu0 %v1253
      %v1372 = vpop.f32.mrf.mxu0
      %v1373 = vadd.f32 %v1353, %v1372
      %1374 = vdwg.mxu0
      %vm1375 = vcmp.ge.f32.partialorder %v1313, 0.0
      %vm1376 = vcmp.ge.f32.partialorder %v1373, 0.0
      %v1377 = vmul.f32 %v1313, 0.2
      %v1378 = vmul.f32 %v1373, 0.2
      %v1379 = vsel %vm1375, %v1313, %v1377
      %v1380 = vsel %vm1376, %v1373, %v1378
      %1381 = vrot.lane.b32.xlu0 %v1379, 17
      %v1382 = vpop.permute.xlu0 %1381
      %1383 = vrot.lane.b32.xlu0 %v1380, 17
      %v1384 = vpop.permute.xlu0 %1383
      %v1385 = vsel %vm437, %v1382, %v1384
      %v1386 = vsel %vm437, %v1384, %v1382
      %v1387 = vmul.f32 %v1386, %v441
      %v1388 = vmul.f32 %v1385, %v442
      %1389 = vrot.lane.b32.xlu0 %v1379, 16
      %v1390 = vpop.permute.xlu0 %1389
      %1391 = vrot.lane.b32.xlu0 %v1380, 16
      %v1392 = vpop.permute.xlu0 %1391
      %v1393 = vsel %vm451, %v1390, %v1392
      %v1394 = vsel %vm451, %v1392, %v1390
      %v1395 = vmul.f32 %v1394, %v455
      %v1396 = vmul.f32 %v1393, %v456
      %1397 = vrot.lane.b32.xlu0 %v1379, 15
      %v1398 = vpop.permute.xlu0 %1397
      %1399 = vrot.lane.b32.xlu0 %v1380, 15
      %v1400 = vpop.permute.xlu0 %1399
      %v1401 = vsel %vm465, %v1398, %v1400
      %v1402 = vsel %vm465, %v1400, %v1398
      %v1403 = vmul.f32 %v1402, %v469
      %v1404 = vmul.f32 %v1401, %v470
      %1405 = vrot.lane.b32.xlu0 %v1379, 1
      %v1406 = vpop.permute.xlu0 %1405
      %1407 = vrot.lane.b32.xlu0 %v1380, 1
      %v1408 = vpop.permute.xlu0 %1407
      %v1409 = vsel %vm479, %v1406, %v1408
      %v1410 = vsel %vm479, %v1408, %v1406
      %v1411 = vmul.f32 %v1410, %v483
      %v1412 = vmul.f32 %v1409, %v484
      %1413 = vrot.lane.b32.xlu0 %v1379, 127
      %v1414 = vpop.permute.xlu0 %1413
      %1415 = vrot.lane.b32.xlu0 %v1380, 127
      %v1416 = vpop.permute.xlu0 %1415
      %v1417 = vsel %vm493, %v1414, %v1416
      %v1418 = vsel %vm493, %v1416, %v1414
      %v1419 = vmul.f32 %v1417, %v497
      %v1420 = vmul.f32 %v1418, %v498
      %1421 = vrot.lane.b32.xlu0 %v1379, 113
      %v1422 = vpop.permute.xlu0 %1421
      %1423 = vrot.lane.b32.xlu0 %v1380, 113
      %v1424 = vpop.permute.xlu0 %1423
      %v1425 = vsel %vm507, %v1422, %v1424
      %v1426 = vsel %vm507, %v1424, %v1422
      %v1427 = vmul.f32 %v1425, %v511
      %v1428 = vmul.f32 %v1426, %v512
      %1429 = vrot.lane.b32.xlu0 %v1379, 112
      %v1430 = vpop.permute.xlu0 %1429
      %1431 = vrot.lane.b32.xlu0 %v1380, 112
      %v1432 = vpop.permute.xlu0 %1431
      %v1433 = vsel %vm521, %v1430, %v1432
      %v1434 = vsel %vm521, %v1432, %v1430
      %v1435 = vmul.f32 %v1433, %v525
      %v1436 = vmul.f32 %v1434, %v526
      %1437 = vrot.lane.b32.xlu0 %v1379, 111
      %v1438 = vpop.permute.xlu0 %1437
      %1439 = vrot.lane.b32.xlu0 %v1380, 111
      %v1440 = vpop.permute.xlu0 %1439
      %v1441 = vsel %vm535, %v1438, %v1440
      %v1442 = vsel %vm535, %v1440, %v1438
      %v1443 = vmul.f32 %v1441, %v539
      %v1444 = vmul.f32 %v1442, %v540
      %1445 = vst [vmem:[#allocation2 + $0x240] sm:$0xff] %v1387
      %1446 = vst [vmem:[#allocation2 + $0x248] sm:$0xff] %v1388
      %1447 = vst [vmem:[#allocation2 + $0x250] sm:$0xff] %v1395
      %1448 = vst [vmem:[#allocation2 + $0x258] sm:$0xff] %v1396
      %1449 = vst [vmem:[#allocation2 + $0x260] sm:$0xff] %v1403
      %1450 = vst [vmem:[#allocation2 + $0x268] sm:$0xff] %v1404
      %1451 = vst [vmem:[#allocation2 + $0x270] sm:$0xff] %v1411
      %1452 = vst [vmem:[#allocation2 + $0x278] sm:$0xff] %v1412
      %1453 = vst [vmem:[#allocation2 + $0x280] sm:$0xff] %v1379
      %1454 = vst [vmem:[#allocation2 + $0x288] sm:$0xff] %v1380
      %1455 = vst [vmem:[#allocation2 + $0x290] sm:$0xff] %v1419
      %1456 = vst [vmem:[#allocation2 + $0x298] sm:$0xff] %v1420
      %1457 = vst [vmem:[#allocation2 + $0x2a0] sm:$0xff] %v1427
      %1458 = vst [vmem:[#allocation2 + $0x2a8] sm:$0xff] %v1428
      %1459 = vst [vmem:[#allocation2 + $0x2b0] sm:$0xff] %v1435
      %1460 = vst [vmem:[#allocation2 + $0x2b8] sm:$0xff] %v1436
      %1461 = vst [vmem:[#allocation2 + $0x2c0] sm:$0xff] %v1443
      %1462 = vst [vmem:[#allocation2 + $0x2c8] sm:$0xff] %v1444
      %v1463 = vld [vmem:[#allocation2] sm:$0xff]
      %v1464 = vld [vmem:[#allocation2 + $0x8] sm:$0xff]
      %v1465 = vld [vmem:[#allocation2 + $0x10] sm:$0xff]
      %v1466 = vld [vmem:[#allocation2 + $0x18] sm:$0xff]
      %v1467 = vld [vmem:[#allocation2 + $0x20] sm:$0xff]
      %v1468 = vld [vmem:[#allocation2 + $0x28] sm:$0xff]
      %v1469 = vld [vmem:[#allocation2 + $0x30] sm:$0xff]
      %v1470 = vld [vmem:[#allocation2 + $0x38] sm:$0xff]
      %v1471 = vld [vmem:[#allocation2 + $0x40] sm:$0xff]
      %v1472 = vld [vmem:[#allocation2 + $0x48] sm:$0xff]
      %v1473 = vld [vmem:[#allocation2 + $0x50] sm:$0xff]
      %v1474 = vld [vmem:[#allocation2 + $0x58] sm:$0xff]
      %v1475 = vld [vmem:[#allocation2 + $0x60] sm:$0xff]
      %v1476 = vld [vmem:[#allocation2 + $0x68] sm:$0xff]
      %v1477 = vld [vmem:[#allocation2 + $0x70] sm:$0xff]
      %v1478 = vld [vmem:[#allocation2 + $0x78] sm:$0xff]
      %v1479 = vld [vmem:[#allocation2 + $0x80] sm:$0xff]
      %v1480 = vld [vmem:[#allocation2 + $0x88] sm:$0xff]
      %v1481 = vld [vmem:[#allocation2 + $0x90] sm:$0xff]
      %v1482 = vld [vmem:[#allocation2 + $0x98] sm:$0xff]
      %v1483 = vld [vmem:[#allocation2 + $0xa0] sm:$0xff]
      %v1484 = vld [vmem:[#allocation2 + $0xa8] sm:$0xff]
      %v1485 = vld [vmem:[#allocation2 + $0xb0] sm:$0xff]
      %v1486 = vld [vmem:[#allocation2 + $0xb8] sm:$0xff]
      %v1487 = vld [vmem:[#allocation2 + $0xc0] sm:$0xff]
      %v1488 = vld [vmem:[#allocation2 + $0xc8] sm:$0xff]
      %v1489 = vld [vmem:[#allocation2 + $0xd0] sm:$0xff]
      %v1490 = vld [vmem:[#allocation2 + $0xd8] sm:$0xff]
      %v1491 = vld [vmem:[#allocation2 + $0xe0] sm:$0xff]
      %v1492 = vld [vmem:[#allocation2 + $0xe8] sm:$0xff]
      %v1493 = vld [vmem:[#allocation2 + $0xf0] sm:$0xff]
      %v1494 = vld [vmem:[#allocation2 + $0xf8] sm:$0xff]
      %v1495 = vld [vmem:[#allocation2 + $0x100] sm:$0xff]
      %v1496 = vld [vmem:[#allocation2 + $0x108] sm:$0xff]
      %v1497 = vld [vmem:[#allocation2 + $0x110] sm:$0xff]
      %v1498 = vld [vmem:[#allocation2 + $0x118] sm:$0xff]
      %v1499 = vld [vmem:[#allocation2 + $0x120] sm:$0xff]
      %v1500 = vld [vmem:[#allocation2 + $0x128] sm:$0xff]
      %v1501 = vld [vmem:[#allocation2 + $0x130] sm:$0xff]
      %v1502 = vld [vmem:[#allocation2 + $0x138] sm:$0xff]
      %v1503 = vld [vmem:[#allocation2 + $0x140] sm:$0xff]
      %v1504 = vld [vmem:[#allocation2 + $0x148] sm:$0xff]
      %v1505 = vld [vmem:[#allocation2 + $0x150] sm:$0xff]
      %v1506 = vld [vmem:[#allocation2 + $0x158] sm:$0xff]
      %v1507 = vld [vmem:[#allocation2 + $0x160] sm:$0xff]
      %v1508 = vld [vmem:[#allocation2 + $0x168] sm:$0xff]
      %v1509 = vld [vmem:[#allocation2 + $0x170] sm:$0xff]
      %v1510 = vld [vmem:[#allocation2 + $0x178] sm:$0xff]
      %v1511 = vld [vmem:[#allocation2 + $0x180] sm:$0xff]
      %v1512 = vld [vmem:[#allocation2 + $0x188] sm:$0xff]
      %v1513 = vld [vmem:[#allocation2 + $0x190] sm:$0xff]
      %v1514 = vld [vmem:[#allocation2 + $0x198] sm:$0xff]
      %v1515 = vld [vmem:[#allocation2 + $0x1a0] sm:$0xff]
      %v1516 = vld [vmem:[#allocation2 + $0x1a8] sm:$0xff]
      %v1517 = vld [vmem:[#allocation2 + $0x1b0] sm:$0xff]
      %v1518 = vld [vmem:[#allocation2 + $0x1b8] sm:$0xff]
      %v1519 = vld [vmem:[#allocation2 + $0x1c0] sm:$0xff]
      %v1520 = vld [vmem:[#allocation2 + $0x1c8] sm:$0xff]
      %v1521 = vld [vmem:[#allocation2 + $0x1d0] sm:$0xff]
      %v1522 = vld [vmem:[#allocation2 + $0x1d8] sm:$0xff]
      %v1523 = vld [vmem:[#allocation2 + $0x1e0] sm:$0xff]
      %v1524 = vld [vmem:[#allocation2 + $0x1e8] sm:$0xff]
      %v1525 = vld [vmem:[#allocation2 + $0x1f0] sm:$0xff]
      %v1526 = vld [vmem:[#allocation2 + $0x1f8] sm:$0xff]
      %v1527 = vld [vmem:[#allocation2 + $0x200] sm:$0xff]
      %v1528 = vld [vmem:[#allocation2 + $0x208] sm:$0xff]
      %v1529 = vld [vmem:[#allocation2 + $0x210] sm:$0xff]
      %v1530 = vld [vmem:[#allocation2 + $0x218] sm:$0xff]
      %v1531 = vld [vmem:[#allocation2 + $0x220] sm:$0xff]
      %v1532 = vld [vmem:[#allocation2 + $0x228] sm:$0xff]
      %v1533 = vld [vmem:[#allocation2 + $0x230] sm:$0xff]
      %v1534 = vld [vmem:[#allocation2 + $0x238] sm:$0xff]
      %v1535 = vld [vmem:[#allocation2 + $0x240] sm:$0xff]
      %v1536 = vld [vmem:[#allocation2 + $0x248] sm:$0xff]
      %v1537 = vld [vmem:[#allocation2 + $0x250] sm:$0xff]
      %v1538 = vld [vmem:[#allocation2 + $0x258] sm:$0xff]
      %v1539 = vld [vmem:[#allocation2 + $0x260] sm:$0xff]
      %v1540 = vld [vmem:[#allocation2 + $0x268] sm:$0xff]
      %v1541 = vld [vmem:[#allocation2 + $0x270] sm:$0xff]
      %v1542 = vld [vmem:[#allocation2 + $0x278] sm:$0xff]
      %v1543 = vld [vmem:[#allocation2 + $0x280] sm:$0xff]
      %v1544 = vld [vmem:[#allocation2 + $0x288] sm:$0xff]
      %v1545 = vld [vmem:[#allocation2 + $0x290] sm:$0xff]
      %v1546 = vld [vmem:[#allocation2 + $0x298] sm:$0xff]
      %v1547 = vld [vmem:[#allocation2 + $0x2a0] sm:$0xff]
      %v1548 = vld [vmem:[#allocation2 + $0x2a8] sm:$0xff]
      %v1549 = vld [vmem:[#allocation2 + $0x2b0] sm:$0xff]
      %v1550 = vld [vmem:[#allocation2 + $0x2b8] sm:$0xff]
      %v1551 = vld [vmem:[#allocation2 + $0x2c0] sm:$0xff]
      %v1552 = vld [vmem:[#allocation2 + $0x2c8] sm:$0xff]
      %v1553 = vld [vmem:[%s6] sm:$0xff]
      %v1554 = vld [vmem:[%s6 + $0x8] sm:$0xff]
      %v1555 = vld [vmem:[%s6 + $0x10] sm:$0xff]
      %v1556 = vld [vmem:[%s11] sm:$0xff]
      %1558 = vset.pattern.permute.xlu0 0
      %1559 = vperm.xlu0 %1558, %v1556
      %v1560 = vpop.permute.xlu0 %1559
      %vm1562 = vcmask 850944
      %v1564 = vsel %vm1562, %v1555, 0
      %1566 = vmatpush.msra.mxu0 %v1493
      %1567 = vmatpush.msra.mxu0 %v1491
      %1568 = vmatpush.msra.mxu0 %v1489
      %1569 = vmatpush.msra.mxu0 %v1487
      %1570 = vmatpush.msra.mxu0 %v1485
      %1571 = vmatpush.msra.mxu0 %v1483
      %1572 = vmatpush.msra.mxu0 %v1481
      %1573 = vmatpush.msra.mxu0 %v1479
      %1574 = vmatpush.msra.mxu0 %v1477
      %1575 = vmatpush.msra.mxu0 %v1475
      %1576 = vmatpush.msra.mxu0 %v1473
      %1577 = vmatpush.msra.mxu0 %v1471
      %1578 = vmatpush.msra.mxu0 %v1469
      %1579 = vmatpush.msra.mxu0 %v1467
      %1580 = vmatpush.msra.mxu0 %v1465
      %1581 = vmatpush.msra.mxu0 %v1463
      %1582 = vmatmul.f32.gmra.mxu0 %v1553
      %v1583 = vpop.f32.mrf.mxu0
      %v1584 = vadd.f32 %v1560, %v1583
      %1585 = vdwg.mxu0
      %1586 = vmatpush.msra.mxu0 %v1525
      %1587 = vmatpush.msra.mxu0 %v1523
      %1588 = vmatpush.msra.mxu0 %v1521
      %1589 = vmatpush.msra.mxu0 %v1519
      %1590 = vmatpush.msra.mxu0 %v1517
      %1591 = vmatpush.msra.mxu0 %v1515
      %1592 = vmatpush.msra.mxu0 %v1513
      %1593 = vmatpush.msra.mxu0 %v1511
      %1594 = vmatpush.msra.mxu0 %v1509
      %1595 = vmatpush.msra.mxu0 %v1507
      %1596 = vmatpush.msra.mxu0 %v1505
      %1597 = vmatpush.msra.mxu0 %v1503
      %1598 = vmatpush.msra.mxu0 %v1501
      %1599 = vmatpush.msra.mxu0 %v1499
      %1600 = vmatpush.msra.mxu0 %v1497
      %1601 = vmatpush.msra.mxu0 %v1495
      %1602 = vmatmul.f32.gmra.mxu0 %v1554
      %v1603 = vpop.f32.mrf.mxu0
      %v1604 = vadd.f32 %v1584, %v1603
      %1605 = vdwg.mxu0
      %1606 = vmatpush.msra.mxu0 0.0
      %1607 = vmatpush.msra.mxu0 0.0
      %1608 = vmatpush.msra.mxu0 0.0
      %1609 = vmatpush.msra.mxu0 %v1551
      %1610 = vmatpush.msra.mxu0 %v1549
      %1611 = vmatpush.msra.mxu0 %v1547
      %1612 = vmatpush.msra.mxu0 %v1545
      %1613 = vmatpush.msra.mxu0 %v1543
      %1614 = vmatpush.msra.mxu0 %v1541
      %1615 = vmatpush.msra.mxu0 %v1539
      %1616 = vmatpush.msra.mxu0 %v1537
      %1617 = vmatpush.msra.mxu0 %v1535
      %1618 = vmatpush.msra.mxu0 %v1533
      %1619 = vmatpush.msra.mxu0 %v1531
      %1620 = vmatpush.msra.mxu0 %v1529
      %1621 = vmatpush.msra.mxu0 %v1527
      %1622 = vmatmul.f32.gmra.mxu0 %v1564
      %v1623 = vpop.f32.mrf.mxu0
      %v1624 = vadd.f32 %v1604, %v1623
      %1625 = vdwg.mxu0
      %1626 = vmatpush.msra.mxu0 %v1494
      %1627 = vmatpush.msra.mxu0 %v1492
      %1628 = vmatpush.msra.mxu0 %v1490
      %1629 = vmatpush.msra.mxu0 %v1488
      %1630 = vmatpush.msra.mxu0 %v1486
      %1631 = vmatpush.msra.mxu0 %v1484
      %1632 = vmatpush.msra.mxu0 %v1482
      %1633 = vmatpush.msra.mxu0 %v1480
      %1634 = vmatpush.msra.mxu0 %v1478
      %1635 = vmatpush.msra.mxu0 %v1476
      %1636 = vmatpush.msra.mxu0 %v1474
      %1637 = vmatpush.msra.mxu0 %v1472
      %1638 = vmatpush.msra.mxu0 %v1470
      %1639 = vmatpush.msra.mxu0 %v1468
      %1640 = vmatpush.msra.mxu0 %v1466
      %1641 = vmatpush.msra.mxu0 %v1464
      %1642 = vmatmul.f32.gmra.mxu0 %v1553
      %v1643 = vpop.f32.mrf.mxu0
      %v1644 = vadd.f32 %v1560, %v1643
      %1645 = vdwg.mxu0
      %1646 = vmatpush.msra.mxu0 %v1526
      %1647 = vmatpush.msra.mxu0 %v1524
      %1648 = vmatpush.msra.mxu0 %v1522
      %1649 = vmatpush.msra.mxu0 %v1520
      %1650 = vmatpush.msra.mxu0 %v1518
      %1651 = vmatpush.msra.mxu0 %v1516
      %1652 = vmatpush.msra.mxu0 %v1514
      %1653 = vmatpush.msra.mxu0 %v1512
      %1654 = vmatpush.msra.mxu0 %v1510
      %1655 = vmatpush.msra.mxu0 %v1508
      %1656 = vmatpush.msra.mxu0 %v1506
      %1657 = vmatpush.msra.mxu0 %v1504
      %1658 = vmatpush.msra.mxu0 %v1502
      %1659 = vmatpush.msra.mxu0 %v1500
      %1660 = vmatpush.msra.mxu0 %v1498
      %1661 = vmatpush.msra.mxu0 %v1496
      %1662 = vmatmul.f32.gmra.mxu0 %v1554
      %v1663 = vpop.f32.mrf.mxu0
      %v1664 = vadd.f32 %v1644, %v1663
      %1665 = vdwg.mxu0
      %1666 = vmatpush.msra.mxu0 0.0
      %1667 = vmatpush.msra.mxu0 0.0
      %1668 = vmatpush.msra.mxu0 0.0
      %1669 = vmatpush.msra.mxu0 %v1552
      %1670 = vmatpush.msra.mxu0 %v1550
      %1671 = vmatpush.msra.mxu0 %v1548
      %1672 = vmatpush.msra.mxu0 %v1546
      %1673 = vmatpush.msra.mxu0 %v1544
      %1674 = vmatpush.msra.mxu0 %v1542
      %1675 = vmatpush.msra.mxu0 %v1540
      %1676 = vmatpush.msra.mxu0 %v1538
      %1677 = vmatpush.msra.mxu0 %v1536
      %1678 = vmatpush.msra.mxu0 %v1534
      %1679 = vmatpush.msra.mxu0 %v1532
      %1680 = vmatpush.msra.mxu0 %v1530
      %1681 = vmatpush.msra.mxu0 %v1528
      %1682 = vmatmul.f32.gmra.mxu0 %v1564
      %v1683 = vpop.f32.mrf.mxu0
      %v1684 = vadd.f32 %v1664, %v1683
      %1685 = vdwg.mxu0
      %1686 = vst [vmem:[%s413] sm:$0xff] %v1624
      %1687 = vst [vmem:[%s413 + $0x8] sm:$0xff] %v1684
      %p1688 = scmp.lt.s32.totalorder %s23, 1
      %s1689 = scalar_select %p1688, %s23, 1
      %s1690 = smul.addr %s1689, 2
      %s1691 = smul.addr %s1690, 8
      %s1692 = scalar_lea.vmem %s12, %s1691
      // Predicated region
      $region69: #{dense_block.1} parent=67 // pred_check
        %p1693 = pneg %p298
      $region70: #{dense_block.1} parent=67 // pred_check_branch
        %1695 = sbr.rel (%p1693) target = $region72
      $region71: #{dense_block.1} parent=67 // pred_region
        _
      $region72: #{dense_block.1} parent=67 // pred_fallthru
        _
    $region68: #{dense_block.1} parent=5 // pred_fallthru
      _
    %p1696 = scmp.le.s32.totalorder 2, %s18
    // Predicated region
    $region73: #{dense_block.1} parent=5 // pred_check
      %p1697 = pneg %p1696
    $region74: #{dense_block.1} parent=5 // pred_check_branch
      %1699 = sbr.rel (%p1697) target = $region76
    $region75: #{dense_block.1} parent=5 // pred_region
      %s1700 = ssub.s32 %s18, 2
      // Predicated region
      $region77: #{dense_block.1} parent=75 // pred_check
        %p1701 = pneg %p304
      $region78: #{dense_block.1} parent=75 // pred_check_branch
        %1703 = sbr.rel (%p1701) target = $region80
      $region79: #{dense_block.1} parent=75 // pred_region
        %p1704 = scmp.lt.s32.totalorder %s24, 1
        %s1705 = scalar_select %p1704, %s24, 1
        %s1706 = smul.addr %s1705, 2
        %s1707 = smul.addr %s1706, 8
        %s1708 = scalar_lea.vmem %s12, %s1707
      $region80: #{dense_block.1} parent=75 // pred_fallthru
        _
    $region76: #{dense_block.1} parent=5 // pred_fallthru
      _
  $region6: #{dense_block.1} parent=0 // loop_footer
    %s22 = sadd.s32 1, %s18
  $region7: #{dense_block.1} parent=0 // loop_footer_branch
    %17 = sbr.rel target = $region3
  $region8: #{dense_block.1} parent=0 // loop_exit
    _

</llo_original>
